<compile_context>
chip_gen: v5e
topology: v5e:2x2
jax: 0.10.0
libtpu: 0.0.40
codegen_flags: <defaults>
</compile_context>

<pallas_src>
import functools

import jax
import jax.numpy as jnp
from jax.experimental import pallas as pl
from jax.experimental.pallas import tpu as pltpu


def _round_up(n, m):
    return ((n + m - 1) // m) * m


def _choose_block_b(B, n_steps=2, max_block=2048):
    """Right-size the batch tile: >=2 grid steps (v7x megacore) without a huge
    zero-padded tail; cap the block so very large batches just add a few more
    steps instead of blowing up VMEM."""
    bb = _round_up(-(-B // n_steps), 8)
    return max(8, min(bb, max_block))


def _mlp_kernel(x_ref, w1_ref, b1_ref, w2_ref, b2_ref,
                w3_ref, b3_ref, w4_ref, b4_ref,
                out_ref, *, clf_lane):
    x = x_ref[...]                                           # (block_b, 15)

    # fc1 + relu
    h1 = jnp.dot(x, w1_ref[...], preferred_element_type=jnp.float32) + b1_ref[...]
    h1 = jnp.maximum(h1, 0.0)

    # fc2 + relu -> embedding (padded lanes 100..127 are exactly 0 by construction)
    emb = jnp.dot(h1, w2_ref[...], preferred_element_type=jnp.float32) + b2_ref[...]
    emb = jnp.maximum(emb, 0.0)

    # fc3 + relu
    h3 = jnp.dot(emb, w3_ref[...], preferred_element_type=jnp.float32) + b3_ref[...]
    h3 = jnp.maximum(h3, 0.0)

    # fc_out + sigmoid: W4's single real column was pre-placed at lane `clf_lane`,
    # so the classifier value lands in emb's spare lane -> one lane-dense output.
    logit = jnp.dot(h3, w4_ref[...], preferred_element_type=jnp.float32) + b4_ref[...]
    clf = jax.nn.sigmoid(logit)                              # valid value at lane clf_lane

    col = jax.lax.broadcasted_iota(jnp.int32, out_ref.shape, 1)
    out_ref[...] = jnp.where(col == clf_lane, clf, emb)


def prepare_params(params):
    """One-time lane-alignment of weights/biases (OUTSIDE the per-call path).

    Zero padding keeps the valid region bit-for-bit equal to the unpadded math:
    zero K rows/columns contribute 0 to every dot product and zero bias lanes stay
    0 through the relu chain. fc_out's single output column is placed at lane
    `clf_lane` (=100) so the kernel can fold clf into the emb output tile.
    """
    w1, b1, w2, b2, w3, b3, w4, b4 = params
    in_len, H1 = w1.shape
    H2, H3, OUT = w2.shape[1], w3.shape[1], w4.shape[1]
    assert OUT == 1

    H1_P = _round_up(H1, 128)      # 500 -> 512
    H2_P = _round_up(H2, 128)      # 100 -> 128
    H3_P = _round_up(H3, 128)      # 100 -> 128
    clf_lane = H2                  # classifier lives in emb's first spare lane

    def pad2(a, rows, cols, col0=0):
        a = a.reshape((-1, a.shape[-1]))
        return jnp.zeros((rows, cols), a.dtype).at[:a.shape[0],
                                                   col0:col0 + a.shape[1]].set(a)

    padded = (
        pad2(w1, in_len, H1_P),            # (15, 512)  — K dim stays 15 (no x padding)
        pad2(b1, 1, H1_P),
        pad2(w2, H1_P, H2_P),
        pad2(b2, 1, H2_P),
        pad2(w3, H2_P, H3_P),
        pad2(b3, 1, H3_P),
        pad2(w4, H3_P, H2_P, col0=clf_lane),   # real column at lane 100
        pad2(b4, 1, H2_P, col0=clf_lane),
    )
    meta = dict(in_len=in_len, H1_P=H1_P, H2=H2, H2_P=H2_P, H3_P=H3_P,
                clf_lane=clf_lane)
    return padded, meta


@functools.partial(jax.jit, static_argnames=("block_b", "clf_lane"))
def _forward_padded(x, w1p, b1p, w2p, b2p, w3p, b3p, w4p, b4p,
                    *, block_b, clf_lane):
    B, in_len = x.shape
    H1_P = w1p.shape[1]
    H2_P = w2p.shape[1]
    H3_P = w3p.shape[1]
    num_blocks = -(-B // block_b)          # ragged last block handled by Pallas

    kernel = functools.partial(_mlp_kernel, clf_lane=clf_lane)

    # Weights/biases never change block index -> single pipeline buffer is enough.
    resident = lambda shape: pl.BlockSpec(shape, lambda i: (0, 0),
                                          pipeline_mode=pl.Buffered(1))
    batched = lambda shape: pl.BlockSpec(shape, lambda i: (i, 0))

    out = pl.pallas_call(
        kernel,
        out_shape=jax.ShapeDtypeStruct((B, H2_P), jnp.float32),
        grid_spec=pltpu.PrefetchScalarGridSpec(
            num_scalar_prefetch=0,
            grid=(num_blocks,),
            in_specs=[
                batched((block_b, in_len)),   # x streamed over batch, K=15 unpadded
                resident((in_len, H1_P)),     # W1
                resident((1, H1_P)),          # b1
                resident((H1_P, H2_P)),       # W2
                resident((1, H2_P)),          # b2
                resident((H2_P, H3_P)),       # W3
                resident((1, H3_P)),          # b3
                resident((H3_P, H2_P)),       # W4 (clf column at lane clf_lane)
                resident((1, H2_P)),          # b4
            ],
            out_specs=batched((block_b, H2_P)),   # emb + clf folded, lane-dense
        ),
        compiler_params=pltpu.CompilerParams(
            dimension_semantics=("parallel",)),
    )(x, w1p, b1p, w2p, b2p, w3p, b3p, w4p, b4p)
    return out


def dnn_model_forward(x, padded_params, meta, *, block_b=None):
    """x: (B, input_len) f32.  Returns (clf (B,1), emb (B,100))."""
    B = x.shape[0]
    if block_b is None:
        block_b = _choose_block_b(B)
    out = _forward_padded(x, *padded_params,
                          block_b=block_b, clf_lane=meta["clf_lane"])
    emb = out[:, :meta["H2"]]
    clf = out[:, meta["clf_lane"]:meta["clf_lane"] + 1]
    return clf, emb


def init_params(key, input_len=15):
    """Deterministic init mimicking torch.nn.Linear (uniform +/- 1/sqrt(fan_in))."""
    def linear(k, fan_in, fan_out):
        kw, kb = jax.random.split(k)
        bound = 1.0 / jnp.sqrt(jnp.float32(fan_in))
        w = jax.random.uniform(kw, (fan_in, fan_out), jnp.float32, -bound, bound)
        b = jax.random.uniform(kb, (1, fan_out), jnp.float32, -bound, bound)
        return w, b

    k1, k2, k3, k4 = jax.random.split(key, 4)
    w1, b1 = linear(k1, input_len, 500)   # fc1
    w2, b2 = linear(k2, 500, 100)         # fc2
    w3, b3 = linear(k3, 100, 100)         # fc3 (embedding=True -> 100 -> 100)
    w4, b4 = linear(k4, 100, 1)           # fc_out
    return (w1, b1, w2, b2, w3, b3, w4, b4)


if __name__ == "__main__":
    key = jax.random.PRNGKey(0)
    kx, kp = jax.random.split(key)

    INPUT_LEN = 15
    BATCH = 300          # not a multiple of the block size -> exercises the ragged tail

    x = jax.random.normal(kx, (BATCH, INPUT_LEN), dtype=jnp.float32)
    raw_params = init_params(kp, input_len=INPUT_LEN)

    # One-time parameter preparation (padding lives outside the forward path).
    padded_params, meta = prepare_params(raw_params)
    padded_params = jax.block_until_ready(padded_params)

    clf, emb = dnn_model_forward(x, padded_params, meta)
    jax.block_until_ready((clf, emb))

    # Reference check in plain JAX (same math) for sanity.
    w1, b1, w2, b2, w3, b3, w4, b4 = raw_params
    h1 = jax.nn.relu(x @ w1 + b1)
    emb_ref = jax.nn.relu(h1 @ w2 + b2)
    h3 = jax.nn.relu(emb_ref @ w3 + b3)
    clf_ref = jax.nn.sigmoid(h3 @ w4 + b4)

    assert clf.shape == (BATCH, 1) and emb.shape == (BATCH, 100)
    assert jnp.allclose(emb, emb_ref, atol=1e-5), "emb mismatch"
    assert jnp.allclose(clf, clf_ref, atol=1e-5), "clf mismatch"

    print("KERNEL_OK")
</pallas_src>

<mosaic_0001>
module attributes {stable_mosaic.version = 11 : i64} {
  func.func @_mlp_kernel(%arg0: i32, %arg1: memref<152x15xf32, #tpu.memory_space<vmem>>, %arg2: memref<15x512xf32, #tpu.memory_space<vmem>>, %arg3: memref<1x512xf32, #tpu.memory_space<vmem>>, %arg4: memref<512x128xf32, #tpu.memory_space<vmem>>, %arg5: memref<1x128xf32, #tpu.memory_space<vmem>>, %arg6: memref<128x128xf32, #tpu.memory_space<vmem>>, %arg7: memref<1x128xf32, #tpu.memory_space<vmem>>, %arg8: memref<128x128xf32, #tpu.memory_space<vmem>>, %arg9: memref<1x128xf32, #tpu.memory_space<vmem>>, %arg10: memref<152x128xf32, #tpu.memory_space<vmem>>) attributes {dimension_semantics = [#tpu.dimension_semantics<parallel>], iteration_bounds = array<i64: 2>, scalar_prefetch = 0 : i64, scratch_operands = 0 : i64, tpu.core_type = #tpu.core_type<tc>, window_params = [{transform_indices = @transform_0, window_bounds = array<i64: 152, 15>}, {pipeline_mode = #tpu.pipeline_mode<synchronous>, transform_indices = @transform_1, window_bounds = array<i64: 15, 512>}, {pipeline_mode = #tpu.pipeline_mode<synchronous>, transform_indices = @transform_2, window_bounds = array<i64: 1, 512>}, {pipeline_mode = #tpu.pipeline_mode<synchronous>, transform_indices = @transform_3, window_bounds = array<i64: 512, 128>}, {pipeline_mode = #tpu.pipeline_mode<synchronous>, transform_indices = @transform_4, window_bounds = array<i64: 1, 128>}, {pipeline_mode = #tpu.pipeline_mode<synchronous>, transform_indices = @transform_5, window_bounds = array<i64: 128, 128>}, {pipeline_mode = #tpu.pipeline_mode<synchronous>, transform_indices = @transform_6, window_bounds = array<i64: 1, 128>}, {pipeline_mode = #tpu.pipeline_mode<synchronous>, transform_indices = @transform_7, window_bounds = array<i64: 128, 128>}, {pipeline_mode = #tpu.pipeline_mode<synchronous>, transform_indices = @transform_8, window_bounds = array<i64: 1, 128>}, {transform_indices = @transform_9, window_bounds = array<i64: 152, 128>}]} {
    %c0 = arith.constant 0 : index
    %c0_0 = arith.constant 0 : index
    %0 = vector.load %arg1[%c0, %c0_0] : memref<152x15xf32, #tpu.memory_space<vmem>>, vector<152x15xf32>
    %c0_1 = arith.constant 0 : index
    %c0_2 = arith.constant 0 : index
    %1 = vector.load %arg2[%c0_1, %c0_2] : memref<15x512xf32, #tpu.memory_space<vmem>>, vector<15x512xf32>
    %cst = arith.constant dense<0.000000e+00> : vector<152x512xf32>
    %2 = tpu.matmul %0, %1, %cst {dimension_numbers = #tpu.dot_dimension_numbers<[1], [0], [0], [1], [0, 0, 1, 1], [], []>} : vector<152x15xf32>, vector<15x512xf32>, vector<152x512xf32> -> vector<152x512xf32>
    %c0_3 = arith.constant 0 : index
    %c0_4 = arith.constant 0 : index
    %3 = vector.load %arg3[%c0_3, %c0_4] : memref<1x512xf32, #tpu.memory_space<vmem>>, vector<1x512xf32>
    %4 = vector.broadcast %3 : vector<1x512xf32> to vector<152x512xf32>
    %5 = arith.addf %2, %4 : vector<152x512xf32>
    %cst_5 = arith.constant 0.000000e+00 : f32
    %6 = vector.broadcast %cst_5 : f32 to vector<152x512xf32>
    %7 = arith.maximumf %5, %6 : vector<152x512xf32>
    %c0_6 = arith.constant 0 : index
    %c0_7 = arith.constant 0 : index
    %8 = vector.load %arg4[%c0_6, %c0_7] : memref<512x128xf32, #tpu.memory_space<vmem>>, vector<512x128xf32>
    %cst_8 = arith.constant dense<0.000000e+00> : vector<152x128xf32>
    %9 = tpu.matmul %7, %8, %cst_8 {dimension_numbers = #tpu.dot_dimension_numbers<[1], [0], [0], [1], [0, 0, 1, 1], [], []>} : vector<152x512xf32>, vector<512x128xf32>, vector<152x128xf32> -> vector<152x128xf32>
    %c0_9 = arith.constant 0 : index
    %c0_10 = arith.constant 0 : index
    %10 = vector.load %arg5[%c0_9, %c0_10] : memref<1x128xf32, #tpu.memory_space<vmem>>, vector<1x128xf32>
    %11 = vector.broadcast %10 : vector<1x128xf32> to vector<152x128xf32>
    %12 = arith.addf %9, %11 : vector<152x128xf32>
    %cst_11 = arith.constant 0.000000e+00 : f32
    %13 = vector.broadcast %cst_11 : f32 to vector<152x128xf32>
    %14 = arith.maximumf %12, %13 : vector<152x128xf32>
    %c0_12 = arith.constant 0 : index
    %c0_13 = arith.constant 0 : index
    %15 = vector.load %arg6[%c0_12, %c0_13] : memref<128x128xf32, #tpu.memory_space<vmem>>, vector<128x128xf32>
    %cst_14 = arith.constant dense<0.000000e+00> : vector<152x128xf32>
    %16 = tpu.matmul %14, %15, %cst_14 {dimension_numbers = #tpu.dot_dimension_numbers<[1], [0], [0], [1], [0, 0, 1, 1], [], []>} : vector<152x128xf32>, vector<128x128xf32>, vector<152x128xf32> -> vector<152x128xf32>
    %c0_15 = arith.constant 0 : index
    %c0_16 = arith.constant 0 : index
    %17 = vector.load %arg7[%c0_15, %c0_16] : memref<1x128xf32, #tpu.memory_space<vmem>>, vector<1x128xf32>
    %18 = vector.broadcast %17 : vector<1x128xf32> to vector<152x128xf32>
    %19 = arith.addf %16, %18 : vector<152x128xf32>
    %cst_17 = arith.constant 0.000000e+00 : f32
    %20 = vector.broadcast %cst_17 : f32 to vector<152x128xf32>
    %21 = arith.maximumf %19, %20 : vector<152x128xf32>
    %c0_18 = arith.constant 0 : index
    %c0_19 = arith.constant 0 : index
    %22 = vector.load %arg8[%c0_18, %c0_19] : memref<128x128xf32, #tpu.memory_space<vmem>>, vector<128x128xf32>
    %cst_20 = arith.constant dense<0.000000e+00> : vector<152x128xf32>
    %23 = tpu.matmul %21, %22, %cst_20 {dimension_numbers = #tpu.dot_dimension_numbers<[1], [0], [0], [1], [0, 0, 1, 1], [], []>} : vector<152x128xf32>, vector<128x128xf32>, vector<152x128xf32> -> vector<152x128xf32>
    %c0_21 = arith.constant 0 : index
    %c0_22 = arith.constant 0 : index
    %24 = vector.load %arg9[%c0_21, %c0_22] : memref<1x128xf32, #tpu.memory_space<vmem>>, vector<1x128xf32>
    %25 = vector.broadcast %24 : vector<1x128xf32> to vector<152x128xf32>
    %26 = arith.addf %23, %25 : vector<152x128xf32>
    %27 = arith.negf %26 : vector<152x128xf32>
    %28 = math.exp %27 : vector<152x128xf32>
    %cst_23 = arith.constant 1.000000e+00 : f32
    %29 = vector.broadcast %cst_23 : f32 to vector<152x128xf32>
    %30 = arith.addf %29, %28 : vector<152x128xf32>
    %31 = arith.divf %29, %30 : vector<152x128xf32>
    %32 = tpu.iota {dimensions = array<i32: 1>} : vector<152x128xi32>
    %c100_i32 = arith.constant 100 : i32
    %33 = vector.broadcast %c100_i32 : i32 to vector<152x128xi32>
    %34 = arith.cmpi eq, %32, %33 : vector<152x128xi32>
    %35 = arith.select %34, %31, %14 : vector<152x128xi1>, vector<152x128xf32>
    %c0_24 = arith.constant 0 : index
    %c0_25 = arith.constant 0 : index
    %36 = vector.load %arg10[%c0_24, %c0_25] : memref<152x128xf32, #tpu.memory_space<vmem>>, vector<152x128xf32>
    tpu.vector_store %arg10[%c0_24, %c0_25], %35 {strides = array<i32>} : memref<152x128xf32, #tpu.memory_space<vmem>>, vector<152x128xf32>,
    return
  }
  func.func @transform_0(%arg0: i32) -> (i32, i32) {
    %c0_i32 = arith.constant 0 : i32
    %c0_i32_0 = arith.constant 0 : i32
    return %arg0, %c0_i32 : i32, i32
  }
  func.func @transform_1(%arg0: i32) -> (i32, i32) {
    %c0_i32 = arith.constant 0 : i32
    %c0_i32_0 = arith.constant 0 : i32
    %c0_i32_1 = arith.constant 0 : i32
    return %c0_i32, %c0_i32_0 : i32, i32
  }
  func.func @transform_2(%arg0: i32) -> (i32, i32) {
    %c0_i32 = arith.constant 0 : i32
    %c0_i32_0 = arith.constant 0 : i32
    %c0_i32_1 = arith.constant 0 : i32
    return %c0_i32, %c0_i32_0 : i32, i32
  }
  func.func @transform_3(%arg0: i32) -> (i32, i32) {
    %c0_i32 = arith.constant 0 : i32
    %c0_i32_0 = arith.constant 0 : i32
    %c0_i32_1 = arith.constant 0 : i32
    return %c0_i32, %c0_i32_0 : i32, i32
  }
  func.func @transform_4(%arg0: i32) -> (i32, i32) {
    %c0_i32 = arith.constant 0 : i32
    %c0_i32_0 = arith.constant 0 : i32
    %c0_i32_1 = arith.constant 0 : i32
    return %c0_i32, %c0_i32_0 : i32, i32
  }
  func.func @transform_5(%arg0: i32) -> (i32, i32) {
    %c0_i32 = arith.constant 0 : i32
    %c0_i32_0 = arith.constant 0 : i32
    %c0_i32_1 = arith.constant 0 : i32
    return %c0_i32, %c0_i32_0 : i32, i32
  }
  func.func @transform_6(%arg0: i32) -> (i32, i32) {
    %c0_i32 = arith.constant 0 : i32
    %c0_i32_0 = arith.constant 0 : i32
    %c0_i32_1 = arith.constant 0 : i32
    return %c0_i32, %c0_i32_0 : i32, i32
  }
  func.func @transform_7(%arg0: i32) -> (i32, i32) {
    %c0_i32 = arith.constant 0 : i32
    %c0_i32_0 = arith.constant 0 : i32
    %c0_i32_1 = arith.constant 0 : i32
    return %c0_i32, %c0_i32_0 : i32, i32
  }
  func.func @transform_8(%arg0: i32) -> (i32, i32) {
    %c0_i32 = arith.constant 0 : i32
    %c0_i32_0 = arith.constant 0 : i32
    %c0_i32_1 = arith.constant 0 : i32
    return %c0_i32, %c0_i32_0 : i32, i32
  }
  func.func @transform_9(%arg0: i32) -> (i32, i32) {
    %c0_i32 = arith.constant 0 : i32
    %c0_i32_0 = arith.constant 0 : i32
    return %arg0, %c0_i32 : i32, i32
  }
}

</mosaic_0001>

<llo_original>
// kernel: _forward_padded.1
$region0: #{_forward_padded.1}
  #allocation0 [shape = 'u32[]', space=smem, size = 0x4, offset = 0x4, fixed_abs, tag = 'smem constant byte address 0x4 - core index']
  #allocation1 [shape = 'u32[72,128]{1,0:T(1,128)}', space=vmem, size = 0x9000, scoped, tag = 'internal scratch']
  %s0 = inlined_call_operand.vmem [shape: f32[300,15], index: 0, kind: input, shape index: {}]
  %s1 = inlined_call_operand.vmem [shape: f32[15,512], index: 1, kind: input, shape index: {}]
  %s2 = inlined_call_operand.vmem [shape: f32[1,512], index: 2, kind: input, shape index: {}]
  %s3 = inlined_call_operand.hbm [shape: f32[512,128], index: 3, kind: input, shape index: {}]
  %s4 = inlined_call_operand.vmem [shape: f32[1,128], index: 4, kind: input, shape index: {}]
  %s5 = inlined_call_operand.vmem [shape: f32[128,128], index: 5, kind: input, shape index: {}]
  %s6 = inlined_call_operand.vmem [shape: f32[1,128], index: 6, kind: input, shape index: {}]
  %s7 = inlined_call_operand.vmem [shape: f32[128,128], index: 7, kind: input, shape index: {}]
  %s8 = inlined_call_operand.vmem [shape: f32[1,128], index: 8, kind: input, shape index: {}]
  %s9 = inlined_call_operand.hbm [shape: f32[300,128], index: 9, kind: output, shape index: {}]
  %s10 = sld [smem:[#allocation0]]
  $region73: #{_forward_padded.1} parent=0
    _
  %s12 = ssub.s32 1, %s10
  %s13 = scalar_select 0, %s12, %s10
  $region1: #{_forward_padded.1} parent=0
    #allocation2 [shape = 'u8[262144]{0}', space=vmem, size = 0x40000, scoped, tag = 'input window, operand 3, single buffered']
    #allocation3 [shape = 's32[2]{0}', space=sflag, size = 0x8, scoped, tag = 'scoped memory for _forward_padded.1']
    #allocation4 [shape = 's32[2]{0}', space=sflag, size = 0x8, scoped, tag = 'scoped memory for _forward_padded.1']
    #allocation5 [shape = 'u8[155648]{0}', space=vmem, size = 0x26000, scoped, tag = 'output window, operand 0']
    %14 = vsyncpa [#allocation3], 0
    %15 = vsyncpa [#allocation4], 0
    %s16 = scalar_lea.sflag [#allocation4], 1
    %17 = vsyncpa %s16, 0
    loop: start=0, step=1, limit=4
    $region2: #{_forward_padded.1} parent=1 // loop_pre_header
      _
    $region3: #{_forward_padded.1} parent=1 // loop_header
      %s19 = sphi 0, %s23
      %p20 = scmp.ge.s32.totalorder %s19, 4
      %s29 = sphi 0, %s31
      %s32 = sphi 0, %s29
      %s33 = sphi 0, %s32
      %s49 = sphi 0, %s33
      %s53 = sphi 0, %s53
      %s55 = sphi 0, %s53
      %s56 = sphi 0, %s55
      %s70 = sphi 0, %s56
      %s74 = sphi 0, %s74
      %s76 = sphi 0, %s74
      %s77 = sphi 0, %s76
      %s91 = sphi 0, %s77
      %s95 = sphi 0, %s95
      %s97 = sphi 0, %s95
      %s98 = sphi 0, %s97
      %s112 = sphi 0, %s98
      %s116 = sphi 0, %s116
      %s118 = sphi 0, %s116
      %s119 = sphi 0, %s118
      %s133 = sphi 0, %s119
      %s137 = sphi 0, %s137
      %s139 = sphi 0, %s137
      %s140 = sphi 0, %s139
      %s154 = sphi 0, %s140
      %s158 = sphi 0, %s158
      %s160 = sphi 0, %s158
      %s161 = sphi 0, %s160
      %s175 = sphi 0, %s161
      %s179 = sphi 0, %s179
      %s181 = sphi 0, %s179
      %s182 = sphi 0, %s181
      %s196 = sphi 0, %s182
      %s200 = sphi 0, %s200
      %s202 = sphi 0, %s200
      %s203 = sphi 0, %s202
      %s217 = sphi 0, %s203
      %s223 = sphi 0, %s225
      %s226 = sphi 0, %s223
      %s227 = sphi 0, %s226
      %s243 = sphi 0, %s227
    $region4: #{_forward_padded.1} parent=1 // loop_header_branch
      %22 = sbr.rel (%p20) target = $region8
    $region5: #{_forward_padded.1} parent=1 // loop_body
      %s24 = ssub.s32 %s19, 1
      %s25 = ssub.s32 %s19, 2
      %s26 = sadd.s32 %s19, 1
      %s27 = ssub.s32 %s19, %s26
      %p28 = scmp.eq.s32.totalorder %s27, 0
      %s30 = sadd.s32 %s29, 1
      %s31 = scalar_select %p28, %s29, %s30
      %p34 = pneg %p28
      %p35 = scmp.eq.s32.totalorder %s19, 1
      %p36 = por %p34, %p35
      %p37 = scmp.ne.s32.totalorder %s29, %s32
      %p38 = scmp.eq.s32.totalorder %s19, 0
      %p39 = por %p37, %p38
      %p40 = scmp.ne.s32.totalorder %s29, %s32
      %p41 = scmp.eq.s32.totalorder %s24, 1
      %p42 = por %p40, %p41
      %p43 = scmp.ne.s32.totalorder %s32, %s33
      %p44 = scmp.eq.s32.totalorder %s24, 0
      %p45 = por %p43, %p44
      %p46 = scmp.ne.s32.totalorder %s32, %s33
      %p47 = scmp.eq.s32.totalorder %s25, 1
      %p48 = por %p46, %p47
      %p50 = scmp.ne.s32.totalorder %s33, %s49
      %p51 = scmp.eq.s32.totalorder %s25, 0
      %p52 = por %p50, %p51
      %s54 = sadd.s32 %s53, 1
      %p57 = scmp.eq.s32.totalorder %s19, 1
      %p58 = scmp.ne.s32.totalorder %s53, %s55
      %p59 = scmp.eq.s32.totalorder %s19, 0
      %p60 = por %p58, %p59
      %p61 = scmp.ne.s32.totalorder %s53, %s55
      %p62 = scmp.eq.s32.totalorder %s24, 1
      %p63 = por %p61, %p62
      %p64 = scmp.ne.s32.totalorder %s55, %s56
      %p65 = scmp.eq.s32.totalorder %s24, 0
      %p66 = por %p64, %p65
      %p67 = scmp.ne.s32.totalorder %s55, %s56
      %p68 = scmp.eq.s32.totalorder %s25, 1
      %p69 = por %p67, %p68
      %p71 = scmp.ne.s32.totalorder %s56, %s70
      %p72 = scmp.eq.s32.totalorder %s25, 0
      %p73 = por %p71, %p72
      %s75 = sadd.s32 %s74, 1
      %p78 = scmp.eq.s32.totalorder %s19, 1
      %p79 = scmp.ne.s32.totalorder %s74, %s76
      %p80 = scmp.eq.s32.totalorder %s19, 0
      %p81 = por %p79, %p80
      %p82 = scmp.ne.s32.totalorder %s74, %s76
      %p83 = scmp.eq.s32.totalorder %s24, 1
      %p84 = por %p82, %p83
      %p85 = scmp.ne.s32.totalorder %s76, %s77
      %p86 = scmp.eq.s32.totalorder %s24, 0
      %p87 = por %p85, %p86
      %p88 = scmp.ne.s32.totalorder %s76, %s77
      %p89 = scmp.eq.s32.totalorder %s25, 1
      %p90 = por %p88, %p89
      %p92 = scmp.ne.s32.totalorder %s77, %s91
      %p93 = scmp.eq.s32.totalorder %s25, 0
      %p94 = por %p92, %p93
      %s96 = sadd.s32 %s95, 1
      %p99 = scmp.eq.s32.totalorder %s19, 1
      %p100 = scmp.ne.s32.totalorder %s95, %s97
      %p101 = scmp.eq.s32.totalorder %s19, 0
      %p102 = por %p100, %p101
      %p103 = scmp.ne.s32.totalorder %s95, %s97
      %p104 = scmp.eq.s32.totalorder %s24, 1
      %p105 = por %p103, %p104
      %p106 = scmp.ne.s32.totalorder %s97, %s98
      %p107 = scmp.eq.s32.totalorder %s24, 0
      %p108 = por %p106, %p107
      %p109 = scmp.ne.s32.totalorder %s97, %s98
      %p110 = scmp.eq.s32.totalorder %s25, 1
      %p111 = por %p109, %p110
      %p113 = scmp.ne.s32.totalorder %s98, %s112
      %p114 = scmp.eq.s32.totalorder %s25, 0
      %p115 = por %p113, %p114
      %s117 = sadd.s32 %s116, 1
      %p120 = scmp.eq.s32.totalorder %s19, 1
      %p121 = scmp.ne.s32.totalorder %s116, %s118
      %p122 = scmp.eq.s32.totalorder %s19, 0
      %p123 = por %p121, %p122
      %p124 = scmp.ne.s32.totalorder %s116, %s118
      %p125 = scmp.eq.s32.totalorder %s24, 1
      %p126 = por %p124, %p125
      %p127 = scmp.ne.s32.totalorder %s118, %s119
      %p128 = scmp.eq.s32.totalorder %s24, 0
      %p129 = por %p127, %p128
      %p130 = scmp.ne.s32.totalorder %s118, %s119
      %p131 = scmp.eq.s32.totalorder %s25, 1
      %p132 = por %p130, %p131
      %p134 = scmp.ne.s32.totalorder %s119, %s133
      %p135 = scmp.eq.s32.totalorder %s25, 0
      %p136 = por %p134, %p135
      %s138 = sadd.s32 %s137, 1
      %p141 = scmp.eq.s32.totalorder %s19, 1
      %p142 = scmp.ne.s32.totalorder %s137, %s139
      %p143 = scmp.eq.s32.totalorder %s19, 0
      %p144 = por %p142, %p143
      %p145 = scmp.ne.s32.totalorder %s137, %s139
      %p146 = scmp.eq.s32.totalorder %s24, 1
      %p147 = por %p145, %p146
      %p148 = scmp.ne.s32.totalorder %s139, %s140
      %p149 = scmp.eq.s32.totalorder %s24, 0
      %p150 = por %p148, %p149
      %p151 = scmp.ne.s32.totalorder %s139, %s140
      %p152 = scmp.eq.s32.totalorder %s25, 1
      %p153 = por %p151, %p152
      %p155 = scmp.ne.s32.totalorder %s140, %s154
      %p156 = scmp.eq.s32.totalorder %s25, 0
      %p157 = por %p155, %p156
      %s159 = sadd.s32 %s158, 1
      %p162 = scmp.eq.s32.totalorder %s19, 1
      %p163 = scmp.ne.s32.totalorder %s158, %s160
      %p164 = scmp.eq.s32.totalorder %s19, 0
      %p165 = por %p163, %p164
      %p166 = scmp.ne.s32.totalorder %s158, %s160
      %p167 = scmp.eq.s32.totalorder %s24, 1
      %p168 = por %p166, %p167
      %p169 = scmp.ne.s32.totalorder %s160, %s161
      %p170 = scmp.eq.s32.totalorder %s24, 0
      %p171 = por %p169, %p170
      %p172 = scmp.ne.s32.totalorder %s160, %s161
      %p173 = scmp.eq.s32.totalorder %s25, 1
      %p174 = por %p172, %p173
      %p176 = scmp.ne.s32.totalorder %s161, %s175
      %p177 = scmp.eq.s32.totalorder %s25, 0
      %p178 = por %p176, %p177
      %s180 = sadd.s32 %s179, 1
      %p183 = scmp.eq.s32.totalorder %s19, 1
      %p184 = scmp.ne.s32.totalorder %s179, %s181
      %p185 = scmp.eq.s32.totalorder %s19, 0
      %p186 = por %p184, %p185
      %p187 = scmp.ne.s32.totalorder %s179, %s181
      %p188 = scmp.eq.s32.totalorder %s24, 1
      %p189 = por %p187, %p188
      %p190 = scmp.ne.s32.totalorder %s181, %s182
      %p191 = scmp.eq.s32.totalorder %s24, 0
      %p192 = por %p190, %p191
      %p193 = scmp.ne.s32.totalorder %s181, %s182
      %p194 = scmp.eq.s32.totalorder %s25, 1
      %p195 = por %p193, %p194
      %p197 = scmp.ne.s32.totalorder %s182, %s196
      %p198 = scmp.eq.s32.totalorder %s25, 0
      %p199 = por %p197, %p198
      %s201 = sadd.s32 %s200, 1
      %p204 = scmp.eq.s32.totalorder %s19, 1
      %p205 = scmp.ne.s32.totalorder %s200, %s202
      %p206 = scmp.eq.s32.totalorder %s19, 0
      %p207 = por %p205, %p206
      %p208 = scmp.ne.s32.totalorder %s200, %s202
      %p209 = scmp.eq.s32.totalorder %s24, 1
      %p210 = por %p208, %p209
      %p211 = scmp.ne.s32.totalorder %s202, %s203
      %p212 = scmp.eq.s32.totalorder %s24, 0
      %p213 = por %p211, %p212
      %p214 = scmp.ne.s32.totalorder %s202, %s203
      %p215 = scmp.eq.s32.totalorder %s25, 1
      %p216 = por %p214, %p215
      %p218 = scmp.ne.s32.totalorder %s203, %s217
      %p219 = scmp.eq.s32.totalorder %s25, 0
      %p220 = por %p218, %p219
      %s221 = ssub.s32 %s19, %s26
      %p222 = scmp.eq.s32.totalorder %s221, 0
      %s224 = sadd.s32 %s223, 1
      %s225 = scalar_select %p222, %s223, %s224
      %p228 = pneg %p222
      %p229 = scmp.eq.s32.totalorder %s19, 1
      %p230 = por %p228, %p229
      %p231 = scmp.ne.s32.totalorder %s223, %s226
      %p232 = scmp.eq.s32.totalorder %s19, 0
      %p233 = por %p231, %p232
      %p234 = scmp.ne.s32.totalorder %s223, %s226
      %p235 = scmp.eq.s32.totalorder %s24, 1
      %p236 = por %p234, %p235
      %p237 = scmp.ne.s32.totalorder %s226, %s227
      %p238 = scmp.eq.s32.totalorder %s24, 0
      %p239 = por %p237, %p238
      %p240 = scmp.ne.s32.totalorder %s226, %s227
      %p241 = scmp.eq.s32.totalorder %s25, 1
      %p242 = por %p240, %p241
      %p244 = scmp.ne.s32.totalorder %s227, %s243
      %p245 = scmp.eq.s32.totalorder %s25, 0
      %p246 = por %p244, %p245
      %p247 = scmp.le.s32.totalorder 1, %s19
      %p248 = scmp.lt.s32.totalorder %s19, 3
      %p249 = pnand %p247, %p248
      %p250 = pneg %p249
      // Predicated region
      $region9: #{_forward_padded.1} parent=5 // pred_check
        _
      $region10: #{_forward_padded.1} parent=5 // pred_check_branch
        %252 = sbr.rel (%p249) target = $region12
      $region11: #{_forward_padded.1} parent=5 // pred_region
        %s253 = ssub.s32 %s19, 1
        // Predicated region
        $region13: #{_forward_padded.1} parent=11 // pred_check
          %p254 = pneg %p66
        $region14: #{_forward_padded.1} parent=11 // pred_check_branch
          %256 = sbr.rel (%p254) target = $region16
        $region15: #{_forward_padded.1} parent=11 // pred_region
          _
        $region16: #{_forward_padded.1} parent=11 // pred_fallthru
          _
        // Predicated region
        $region17: #{_forward_padded.1} parent=11 // pred_check
          %p257 = pneg %p87
        $region18: #{_forward_padded.1} parent=11 // pred_check_branch
          %259 = sbr.rel (%p257) target = $region20
        $region19: #{_forward_padded.1} parent=11 // pred_region
          _
        $region20: #{_forward_padded.1} parent=11 // pred_fallthru
          _
        // Predicated region
        $region21: #{_forward_padded.1} parent=11 // pred_check
          %p260 = pneg %p108
        $region22: #{_forward_padded.1} parent=11 // pred_check_branch
          %262 = sbr.rel (%p260) target = $region24
        $region23: #{_forward_padded.1} parent=11 // pred_region
          %264 = vsyncadd [#allocation3], 0
          %s265 = sshll.u32 %s3, 4
          %s266 = int_to_ptr.hbm [resolvable:$true] %s265
          %s267 = sshll.u32 [#allocation2], 4
          %s268 = int_to_ptr.vmem [resolvable:$true] %s267
          %273 = dma.hbm_to_vmem [thread:$0]  %s266, 8192, %s268, [#allocation3], 128, 128, 8
        $region24: #{_forward_padded.1} parent=11 // pred_fallthru
          _
        // Predicated region
        $region25: #{_forward_padded.1} parent=11 // pred_check
          %p274 = pneg %p129
        $region26: #{_forward_padded.1} parent=11 // pred_check_branch
          %276 = sbr.rel (%p274) target = $region28
        $region27: #{_forward_padded.1} parent=11 // pred_region
          _
        $region28: #{_forward_padded.1} parent=11 // pred_fallthru
          _
        // Predicated region
        $region29: #{_forward_padded.1} parent=11 // pred_check
          %p277 = pneg %p150
        $region30: #{_forward_padded.1} parent=11 // pred_check_branch
          %279 = sbr.rel (%p277) target = $region32
        $region31: #{_forward_padded.1} parent=11 // pred_region
          _
        $region32: #{_forward_padded.1} parent=11 // pred_fallthru
          _
        // Predicated region
        $region33: #{_forward_padded.1} parent=11 // pred_check
          %p280 = pneg %p171
        $region34: #{_forward_padded.1} parent=11 // pred_check_branch
          %282 = sbr.rel (%p280) target = $region36
        $region35: #{_forward_padded.1} parent=11 // pred_region
          _
        $region36: #{_forward_padded.1} parent=11 // pred_fallthru
          _
        // Predicated region
        $region37: #{_forward_padded.1} parent=11 // pred_check
          %p283 = pneg %p192
        $region38: #{_forward_padded.1} parent=11 // pred_check_branch
          %285 = sbr.rel (%p283) target = $region40
        $region39: #{_forward_padded.1} parent=11 // pred_region
          _
        $region40: #{_forward_padded.1} parent=11 // pred_fallthru
          _
        // Predicated region
        $region41: #{_forward_padded.1} parent=11 // pred_check
          %p286 = pneg %p213
        $region42: #{_forward_padded.1} parent=11 // pred_check_branch
          %288 = sbr.rel (%p286) target = $region44
        $region43: #{_forward_padded.1} parent=11 // pred_region
          _
        $region44: #{_forward_padded.1} parent=11 // pred_fallthru
          _
      $region12: #{_forward_padded.1} parent=5 // pred_fallthru
        _
      %p289 = scmp.lt.s32.totalorder %s19, 2
      // Predicated region
      $region45: #{_forward_padded.1} parent=5 // pred_check
        %p290 = pneg %p289
      $region46: #{_forward_padded.1} parent=5 // pred_check_branch
        %292 = sbr.rel (%p290) target = $region48
      $region47: #{_forward_padded.1} parent=5 // pred_region
        // Predicated region
        $region49: #{_forward_padded.1} parent=47 // pred_check
          %p293 = pneg %p39
        $region50: #{_forward_padded.1} parent=47 // pred_check_branch
          %295 = sbr.rel (%p293) target = $region52
        $region51: #{_forward_padded.1} parent=47 // pred_region
          %s296 = smul.u32 19, %s19
          %p297 = scmp.lt.s32.totalorder %s296, 37
          %s298 = scalar_select %p297, %s296, 37
          %s299 = smul.addr %s298, 8
          %s300 = scalar_lea.vmem %s0, %s299
          %s301 = smul.u32 19, %s19
        $region52: #{_forward_padded.1} parent=47 // pred_fallthru
          _
      $region48: #{_forward_padded.1} parent=5 // pred_fallthru
        _
      %p302 = scmp.le.s32.totalorder 1, %s19
      %p303 = scmp.lt.s32.totalorder %s19, 3
      %p304 = pnand %p302, %p303
      %p305 = pneg %p304
      // Predicated region
      $region53: #{_forward_padded.1} parent=5 // pred_check
        _
      $region54: #{_forward_padded.1} parent=5 // pred_check_branch
        %307 = sbr.rel (%p304) target = $region56
      $region55: #{_forward_padded.1} parent=5 // pred_region
        %s308 = ssub.s32 %s19, 1
        // Predicated region
        $region57: #{_forward_padded.1} parent=55 // pred_check
          %p309 = pneg %p108
        $region58: #{_forward_padded.1} parent=55 // pred_check_branch
          %311 = sbr.rel (%p309) target = $region60
        $region59: #{_forward_padded.1} parent=55 // pred_region
          %313 = dma.done [#allocation3], 8192
        $region60: #{_forward_padded.1} parent=55 // pred_fallthru
          _
        %s314 = smul.u32 19, %s24
        %p315 = scmp.lt.s32.totalorder %s314, 37
        %s316 = scalar_select %p315, %s314, 37
        %s317 = smul.addr %s316, 8
        %s318 = scalar_lea.vmem %s0, %s317
        %p319 = pneg %p45
        %p320 = pneg %p42
        %p321 = pneg %p66
        %p322 = pneg %p63
        %p323 = pneg %p87
        %p324 = pneg %p84
        %p325 = pneg %p108
        %p326 = pneg %p105
        %p327 = pneg %p129
        %p328 = pneg %p126
        %p329 = pneg %p150
        %p330 = pneg %p147
        %p331 = pneg %p171
        %p332 = pneg %p168
        %p333 = pneg %p192
        %p334 = pneg %p189
        %p335 = pneg %p213
        %p336 = pneg %p210
        %p337 = pneg %p239
        %p338 = pneg %p236
        %s339 = sand.u32 %s226, 1
        %s340 = scalar_lea.sflag [#allocation4], %s339
        %s341 = sand.u32 %s226, 1
        %s342 = smul.addr %s341, 152
        %s343 = scalar_lea.vmem [#allocation5], %s342
        %s344 = smul.u32 19, %s24
        %p345 = scmp.lt.s32.totalorder %s344, 37
        %s346 = scalar_select %p345, %s344, 37
        %s347 = smul.addr %s346, 8
        %s348 = scalar_lea.vmem %s0, %s347
        %s349 = smul.u32 19, %s24
        %s350 = smul.u32 19, %s24
        %v351 = vld [vmem:[%s348] sm:$0xff]
        %v352 = vld [vmem:[%s348 + $0x8] sm:$0xff]
        %v353 = vld [vmem:[%s348 + $0x10] sm:$0xff]
        %v354 = vld [vmem:[%s348 + $0x18] sm:$0xff]
        %v355 = vld [vmem:[%s348 + $0x20] sm:$0xff]
        %v356 = vld [vmem:[%s348 + $0x28] sm:$0xff]
        %v357 = vld [vmem:[%s348 + $0x30] sm:$0xff]
        %v358 = vld [vmem:[%s348 + $0x38] sm:$0xff]
        %v359 = vld [vmem:[%s348 + $0x40] sm:$0xff]
        %v360 = vld [vmem:[%s348 + $0x48] sm:$0xff]
        %v361 = vld [vmem:[%s348 + $0x50] sm:$0xff]
        %v362 = vld [vmem:[%s348 + $0x58] sm:$0xff]
        %v363 = vld [vmem:[%s348 + $0x60] sm:$0xff]
        %v364 = vld [vmem:[%s348 + $0x68] sm:$0xff]
        %v365 = vld [vmem:[%s348 + $0x70] sm:$0xff]
        %v366 = vld [vmem:[%s348 + $0x78] sm:$0xff]
        %v367 = vld [vmem:[%s348 + $0x80] sm:$0xff]
        %v368 = vld [vmem:[%s348 + $0x88] sm:$0xff]
        %v369 = vld [vmem:[%s348 + $0x90] sm:$0xff]
        %v370 = vld [vmem:[%s1] sm:$0xff]
        %v371 = vld [vmem:[%s1 + $0x8] sm:$0xff]
        %v372 = vld [vmem:[%s1 + $0x10] sm:$0xff]
        %v373 = vld [vmem:[%s1 + $0x18] sm:$0xff]
        %v374 = vld [vmem:[%s1 + $0x20] sm:$0x7f]
        %v375 = vld [vmem:[%s1 + $0x28] sm:$0x7f]
        %v376 = vld [vmem:[%s1 + $0x30] sm:$0x7f]
        %v377 = vld [vmem:[%s1 + $0x38] sm:$0x7f]
        %v378 = vld [vmem:[%s2] sm:$0xf]
        %v380 = vperm.slane %v378, 0
        %v381 = vperm.slane %v378, 1
        %v382 = vperm.slane %v378, 2
        %v383 = vperm.slane %v378, 3
        %vm388 = vcmask 121856
        %v390 = vsel %vm388, %v351, 0
        %v393 = vsel %vm388, %v352, 0
        %v396 = vsel %vm388, %v353, 0
        %v399 = vsel %vm388, %v354, 0
        %v402 = vsel %vm388, %v355, 0
        %v405 = vsel %vm388, %v356, 0
        %v408 = vsel %vm388, %v357, 0
        %v411 = vsel %vm388, %v358, 0
        %v414 = vsel %vm388, %v359, 0
        %v417 = vsel %vm388, %v360, 0
        %v420 = vsel %vm388, %v361, 0
        %v423 = vsel %vm388, %v362, 0
        %v426 = vsel %vm388, %v363, 0
        %v429 = vsel %vm388, %v364, 0
        %v432 = vsel %vm388, %v365, 0
        %v435 = vsel %vm388, %v366, 0
        %v438 = vsel %vm388, %v367, 0
        %v441 = vsel %vm388, %v368, 0
        %v444 = vsel %vm388, %v369, 0
        %vm446 = vcmask 1046528
        %v448 = vsel %vm446, %v374, 0
        %v451 = vsel %vm446, %v375, 0
        %v454 = vsel %vm446, %v376, 0
        %v457 = vsel %vm446, %v377, 0
        %459 = vmatpush.msra.mxu0 0.0
        %460 = vmatpush.msra.mxu0 0.0
        %461 = vmatpush.msra.mxu0 0.0
        %462 = vmatpush.msra.mxu0 0.0
        %463 = vmatpush.msra.mxu0 0.0
        %464 = vmatpush.msra.mxu0 0.0
        %465 = vmatpush.msra.mxu0 0.0
        %466 = vmatpush.msra.mxu0 0.0
        %467 = vmatpush.msra.mxu0 0.0
        %468 = vmatpush.msra.mxu0 0.0
        %469 = vmatpush.msra.mxu0 0.0
        %470 = vmatpush.msra.mxu0 0.0
        %471 = vmatpush.msra.mxu0 0.0
        %472 = vmatpush.msra.mxu0 0.0
        %473 = vmatpush.msra.mxu0 %v448
        %474 = vmatpush.msra.mxu0 %v370
        %475 = vmatmul.f32.gmra.mxu0 %v390
        %v476 = vpop.f32.mrf.mxu0
        %v477 = vadd.f32 %v380, %v476
        %478 = vmatmul.f32.gmra.mxu0 %v393
        %v479 = vpop.f32.mrf.mxu0
        %v480 = vadd.f32 %v380, %v479
        %481 = vmatmul.f32.gmra.mxu0 %v396
        %v482 = vpop.f32.mrf.mxu0
        %v483 = vadd.f32 %v380, %v482
        %484 = vmatmul.f32.gmra.mxu0 %v399
        %v485 = vpop.f32.mrf.mxu0
        %v486 = vadd.f32 %v380, %v485
        %487 = vmatmul.f32.gmra.mxu0 %v402
        %v488 = vpop.f32.mrf.mxu0
        %v489 = vadd.f32 %v380, %v488
        %490 = vmatmul.f32.gmra.mxu0 %v405
        %v491 = vpop.f32.mrf.mxu0
        %v492 = vadd.f32 %v380, %v491
        %493 = vmatmul.f32.gmra.mxu0 %v408
        %v494 = vpop.f32.mrf.mxu0
        %v495 = vadd.f32 %v380, %v494
        %496 = vmatmul.f32.gmra.mxu0 %v411
        %v497 = vpop.f32.mrf.mxu0
        %v498 = vadd.f32 %v380, %v497
        %499 = vmatmul.f32.gmra.mxu0 %v414
        %v500 = vpop.f32.mrf.mxu0
        %v501 = vadd.f32 %v380, %v500
        %502 = vmatmul.f32.gmra.mxu0 %v417
        %v503 = vpop.f32.mrf.mxu0
        %v504 = vadd.f32 %v380, %v503
        %505 = vmatmul.f32.gmra.mxu0 %v420
        %v506 = vpop.f32.mrf.mxu0
        %v507 = vadd.f32 %v380, %v506
        %508 = vmatmul.f32.gmra.mxu0 %v423
        %v509 = vpop.f32.mrf.mxu0
        %v510 = vadd.f32 %v380, %v509
        %511 = vmatmul.f32.gmra.mxu0 %v426
        %v512 = vpop.f32.mrf.mxu0
        %v513 = vadd.f32 %v380, %v512
        %514 = vmatmul.f32.gmra.mxu0 %v429
        %v515 = vpop.f32.mrf.mxu0
        %v516 = vadd.f32 %v380, %v515
        %517 = vmatmul.f32.gmra.mxu0 %v432
        %v518 = vpop.f32.mrf.mxu0
        %v519 = vadd.f32 %v380, %v518
        %520 = vmatmul.f32.gmra.mxu0 %v435
        %v521 = vpop.f32.mrf.mxu0
        %v522 = vadd.f32 %v380, %v521
        %523 = vmatmul.f32.gmra.mxu0 %v438
        %v524 = vpop.f32.mrf.mxu0
        %v525 = vadd.f32 %v380, %v524
        %526 = vmatmul.f32.gmra.mxu0 %v441
        %v527 = vpop.f32.mrf.mxu0
        %v528 = vadd.f32 %v380, %v527
        %529 = vmatmul.f32.gmra.mxu0 %v444
        %v530 = vpop.f32.mrf.mxu0
        %v531 = vadd.f32 %v380, %v530
        %532 = vdwg.mxu0
        %533 = vmatpush.msra.mxu0 0.0
        %534 = vmatpush.msra.mxu0 0.0
        %535 = vmatpush.msra.mxu0 0.0
        %536 = vmatpush.msra.mxu0 0.0
        %537 = vmatpush.msra.mxu0 0.0
        %538 = vmatpush.msra.mxu0 0.0
        %539 = vmatpush.msra.mxu0 0.0
        %540 = vmatpush.msra.mxu0 0.0
        %541 = vmatpush.msra.mxu0 0.0
        %542 = vmatpush.msra.mxu0 0.0
        %543 = vmatpush.msra.mxu0 0.0
        %544 = vmatpush.msra.mxu0 0.0
        %545 = vmatpush.msra.mxu0 0.0
        %546 = vmatpush.msra.mxu0 0.0
        %547 = vmatpush.msra.mxu0 %v451
        %548 = vmatpush.msra.mxu0 %v371
        %549 = vmatmul.f32.gmra.mxu0 %v390
        %v550 = vpop.f32.mrf.mxu0
        %v551 = vadd.f32 %v381, %v550
        %552 = vmatmul.f32.gmra.mxu0 %v393
        %v553 = vpop.f32.mrf.mxu0
        %v554 = vadd.f32 %v381, %v553
        %555 = vmatmul.f32.gmra.mxu0 %v396
        %v556 = vpop.f32.mrf.mxu0
        %v557 = vadd.f32 %v381, %v556
        %558 = vmatmul.f32.gmra.mxu0 %v399
        %v559 = vpop.f32.mrf.mxu0
        %v560 = vadd.f32 %v381, %v559
        %561 = vmatmul.f32.gmra.mxu0 %v402
        %v562 = vpop.f32.mrf.mxu0
        %v563 = vadd.f32 %v381, %v562
        %564 = vmatmul.f32.gmra.mxu0 %v405
        %v565 = vpop.f32.mrf.mxu0
        %v566 = vadd.f32 %v381, %v565
        %567 = vmatmul.f32.gmra.mxu0 %v408
        %v568 = vpop.f32.mrf.mxu0
        %v569 = vadd.f32 %v381, %v568
        %570 = vmatmul.f32.gmra.mxu0 %v411
        %v571 = vpop.f32.mrf.mxu0
        %v572 = vadd.f32 %v381, %v571
        %573 = vmatmul.f32.gmra.mxu0 %v414
        %v574 = vpop.f32.mrf.mxu0
        %v575 = vadd.f32 %v381, %v574
        %576 = vmatmul.f32.gmra.mxu0 %v417
        %v577 = vpop.f32.mrf.mxu0
        %v578 = vadd.f32 %v381, %v577
        %579 = vmatmul.f32.gmra.mxu0 %v420
        %v580 = vpop.f32.mrf.mxu0
        %v581 = vadd.f32 %v381, %v580
        %582 = vmatmul.f32.gmra.mxu0 %v423
        %v583 = vpop.f32.mrf.mxu0
        %v584 = vadd.f32 %v381, %v583
        %585 = vmatmul.f32.gmra.mxu0 %v426
        %v586 = vpop.f32.mrf.mxu0
        %v587 = vadd.f32 %v381, %v586
        %588 = vmatmul.f32.gmra.mxu0 %v429
        %v589 = vpop.f32.mrf.mxu0
        %v590 = vadd.f32 %v381, %v589
        %591 = vmatmul.f32.gmra.mxu0 %v432
        %v592 = vpop.f32.mrf.mxu0
        %v593 = vadd.f32 %v381, %v592
        %594 = vmatmul.f32.gmra.mxu0 %v435
        %v595 = vpop.f32.mrf.mxu0
        %v596 = vadd.f32 %v381, %v595
        %597 = vmatmul.f32.gmra.mxu0 %v438
        %v598 = vpop.f32.mrf.mxu0
        %v599 = vadd.f32 %v381, %v598
        %600 = vmatmul.f32.gmra.mxu0 %v441
        %v601 = vpop.f32.mrf.mxu0
        %v602 = vadd.f32 %v381, %v601
        %603 = vmatmul.f32.gmra.mxu0 %v444
        %v604 = vpop.f32.mrf.mxu0
        %v605 = vadd.f32 %v381, %v604
        %606 = vdwg.mxu0
        %607 = vmatpush.msra.mxu0 0.0
        %608 = vmatpush.msra.mxu0 0.0
        %609 = vmatpush.msra.mxu0 0.0
        %610 = vmatpush.msra.mxu0 0.0
        %611 = vmatpush.msra.mxu0 0.0
        %612 = vmatpush.msra.mxu0 0.0
        %613 = vmatpush.msra.mxu0 0.0
        %614 = vmatpush.msra.mxu0 0.0
        %615 = vmatpush.msra.mxu0 0.0
        %616 = vmatpush.msra.mxu0 0.0
        %617 = vmatpush.msra.mxu0 0.0
        %618 = vmatpush.msra.mxu0 0.0
        %619 = vmatpush.msra.mxu0 0.0
        %620 = vmatpush.msra.mxu0 0.0
        %621 = vmatpush.msra.mxu0 %v454
        %622 = vmatpush.msra.mxu0 %v372
        %623 = vmatmul.f32.gmra.mxu0 %v390
        %v624 = vpop.f32.mrf.mxu0
        %v625 = vadd.f32 %v382, %v624
        %626 = vmatmul.f32.gmra.mxu0 %v393
        %v627 = vpop.f32.mrf.mxu0
        %v628 = vadd.f32 %v382, %v627
        %629 = vmatmul.f32.gmra.mxu0 %v396
        %v630 = vpop.f32.mrf.mxu0
        %v631 = vadd.f32 %v382, %v630
        %632 = vmatmul.f32.gmra.mxu0 %v399
        %v633 = vpop.f32.mrf.mxu0
        %v634 = vadd.f32 %v382, %v633
        %635 = vmatmul.f32.gmra.mxu0 %v402
        %v636 = vpop.f32.mrf.mxu0
        %v637 = vadd.f32 %v382, %v636
        %638 = vmatmul.f32.gmra.mxu0 %v405
        %v639 = vpop.f32.mrf.mxu0
        %v640 = vadd.f32 %v382, %v639
        %641 = vmatmul.f32.gmra.mxu0 %v408
        %v642 = vpop.f32.mrf.mxu0
        %v643 = vadd.f32 %v382, %v642
        %644 = vmatmul.f32.gmra.mxu0 %v411
        %v645 = vpop.f32.mrf.mxu0
        %v646 = vadd.f32 %v382, %v645
        %647 = vmatmul.f32.gmra.mxu0 %v414
        %v648 = vpop.f32.mrf.mxu0
        %v649 = vadd.f32 %v382, %v648
        %650 = vmatmul.f32.gmra.mxu0 %v417
        %v651 = vpop.f32.mrf.mxu0
        %v652 = vadd.f32 %v382, %v651
        %653 = vmatmul.f32.gmra.mxu0 %v420
        %v654 = vpop.f32.mrf.mxu0
        %v655 = vadd.f32 %v382, %v654
        %656 = vmatmul.f32.gmra.mxu0 %v423
        %v657 = vpop.f32.mrf.mxu0
        %v658 = vadd.f32 %v382, %v657
        %659 = vmatmul.f32.gmra.mxu0 %v426
        %v660 = vpop.f32.mrf.mxu0
        %v661 = vadd.f32 %v382, %v660
        %662 = vmatmul.f32.gmra.mxu0 %v429
        %v663 = vpop.f32.mrf.mxu0
        %v664 = vadd.f32 %v382, %v663
        %665 = vmatmul.f32.gmra.mxu0 %v432
        %v666 = vpop.f32.mrf.mxu0
        %v667 = vadd.f32 %v382, %v666
        %668 = vmatmul.f32.gmra.mxu0 %v435
        %v669 = vpop.f32.mrf.mxu0
        %v670 = vadd.f32 %v382, %v669
        %671 = vmatmul.f32.gmra.mxu0 %v438
        %v672 = vpop.f32.mrf.mxu0
        %v673 = vadd.f32 %v382, %v672
        %674 = vmatmul.f32.gmra.mxu0 %v441
        %v675 = vpop.f32.mrf.mxu0
        %v676 = vadd.f32 %v382, %v675
        %677 = vmatmul.f32.gmra.mxu0 %v444
        %v678 = vpop.f32.mrf.mxu0
        %v679 = vadd.f32 %v382, %v678
        %680 = vdwg.mxu0
        %681 = vmatpush.msra.mxu0 0.0
        %682 = vmatpush.msra.mxu0 0.0
        %683 = vmatpush.msra.mxu0 0.0
        %684 = vmatpush.msra.mxu0 0.0
        %685 = vmatpush.msra.mxu0 0.0
        %686 = vmatpush.msra.mxu0 0.0
        %687 = vmatpush.msra.mxu0 0.0
        %688 = vmatpush.msra.mxu0 0.0
        %689 = vmatpush.msra.mxu0 0.0
        %690 = vmatpush.msra.mxu0 0.0
        %691 = vmatpush.msra.mxu0 0.0
        %692 = vmatpush.msra.mxu0 0.0
        %693 = vmatpush.msra.mxu0 0.0
        %694 = vmatpush.msra.mxu0 0.0
        %695 = vmatpush.msra.mxu0 %v457
        %696 = vmatpush.msra.mxu0 %v373
        %697 = vmatmul.f32.gmra.mxu0 %v390
        %v698 = vpop.f32.mrf.mxu0
        %v699 = vadd.f32 %v383, %v698
        %700 = vmatmul.f32.gmra.mxu0 %v393
        %v701 = vpop.f32.mrf.mxu0
        %v702 = vadd.f32 %v383, %v701
        %703 = vmatmul.f32.gmra.mxu0 %v396
        %v704 = vpop.f32.mrf.mxu0
        %v705 = vadd.f32 %v383, %v704
        %706 = vmatmul.f32.gmra.mxu0 %v399
        %v707 = vpop.f32.mrf.mxu0
        %v708 = vadd.f32 %v383, %v707
        %709 = vmatmul.f32.gmra.mxu0 %v402
        %v710 = vpop.f32.mrf.mxu0
        %v711 = vadd.f32 %v383, %v710
        %712 = vmatmul.f32.gmra.mxu0 %v405
        %v713 = vpop.f32.mrf.mxu0
        %v714 = vadd.f32 %v383, %v713
        %715 = vmatmul.f32.gmra.mxu0 %v408
        %v716 = vpop.f32.mrf.mxu0
        %v717 = vadd.f32 %v383, %v716
        %718 = vmatmul.f32.gmra.mxu0 %v411
        %v719 = vpop.f32.mrf.mxu0
        %v720 = vadd.f32 %v383, %v719
        %721 = vmatmul.f32.gmra.mxu0 %v414
        %v722 = vpop.f32.mrf.mxu0
        %v723 = vadd.f32 %v383, %v722
        %724 = vmatmul.f32.gmra.mxu0 %v417
        %v725 = vpop.f32.mrf.mxu0
        %v726 = vadd.f32 %v383, %v725
        %727 = vmatmul.f32.gmra.mxu0 %v420
        %v728 = vpop.f32.mrf.mxu0
        %v729 = vadd.f32 %v383, %v728
        %730 = vmatmul.f32.gmra.mxu0 %v423
        %v731 = vpop.f32.mrf.mxu0
        %v732 = vadd.f32 %v383, %v731
        %733 = vmatmul.f32.gmra.mxu0 %v426
        %v734 = vpop.f32.mrf.mxu0
        %v735 = vadd.f32 %v383, %v734
        %736 = vmatmul.f32.gmra.mxu0 %v429
        %v737 = vpop.f32.mrf.mxu0
        %v738 = vadd.f32 %v383, %v737
        %739 = vmatmul.f32.gmra.mxu0 %v432
        %v740 = vpop.f32.mrf.mxu0
        %v741 = vadd.f32 %v383, %v740
        %742 = vmatmul.f32.gmra.mxu0 %v435
        %v743 = vpop.f32.mrf.mxu0
        %v744 = vadd.f32 %v383, %v743
        %745 = vmatmul.f32.gmra.mxu0 %v438
        %v746 = vpop.f32.mrf.mxu0
        %v747 = vadd.f32 %v383, %v746
        %748 = vmatmul.f32.gmra.mxu0 %v441
        %v749 = vpop.f32.mrf.mxu0
        %v750 = vadd.f32 %v383, %v749
        %751 = vmatmul.f32.gmra.mxu0 %v444
        %v752 = vpop.f32.mrf.mxu0
        %v753 = vadd.f32 %v383, %v752
        %754 = vdwg.mxu0
        %v755 = vmax.f32 %v477, 0.0
        %v756 = vmax.f32 %v551, 0.0
        %v757 = vmax.f32 %v625, 0.0
        %v758 = vmax.f32 %v699, 0.0
        %v759 = vmax.f32 %v480, 0.0
        %v760 = vmax.f32 %v554, 0.0
        %v761 = vmax.f32 %v628, 0.0
        %v762 = vmax.f32 %v702, 0.0
        %v763 = vmax.f32 %v483, 0.0
        %v764 = vmax.f32 %v557, 0.0
        %v765 = vmax.f32 %v631, 0.0
        %v766 = vmax.f32 %v705, 0.0
        %v767 = vmax.f32 %v486, 0.0
        %v768 = vmax.f32 %v560, 0.0
        %v769 = vmax.f32 %v634, 0.0
        %v770 = vmax.f32 %v708, 0.0
        %v771 = vmax.f32 %v489, 0.0
        %v772 = vmax.f32 %v563, 0.0
        %v773 = vmax.f32 %v637, 0.0
        %v774 = vmax.f32 %v711, 0.0
        %v775 = vmax.f32 %v492, 0.0
        %v776 = vmax.f32 %v566, 0.0
        %v777 = vmax.f32 %v640, 0.0
        %v778 = vmax.f32 %v714, 0.0
        %v779 = vmax.f32 %v495, 0.0
        %v780 = vmax.f32 %v569, 0.0
        %v781 = vmax.f32 %v643, 0.0
        %v782 = vmax.f32 %v717, 0.0
        %v783 = vmax.f32 %v498, 0.0
        %v784 = vmax.f32 %v572, 0.0
        %v785 = vmax.f32 %v646, 0.0
        %v786 = vmax.f32 %v720, 0.0
        %v787 = vmax.f32 %v501, 0.0
        %v788 = vmax.f32 %v575, 0.0
        %v789 = vmax.f32 %v649, 0.0
        %v790 = vmax.f32 %v723, 0.0
        %v791 = vmax.f32 %v504, 0.0
        %v792 = vmax.f32 %v578, 0.0
        %v793 = vmax.f32 %v652, 0.0
        %v794 = vmax.f32 %v726, 0.0
        %v795 = vmax.f32 %v507, 0.0
        %v796 = vmax.f32 %v581, 0.0
        %v797 = vmax.f32 %v655, 0.0
        %v798 = vmax.f32 %v729, 0.0
        %v799 = vmax.f32 %v510, 0.0
        %v800 = vmax.f32 %v584, 0.0
        %v801 = vmax.f32 %v658, 0.0
        %v802 = vmax.f32 %v732, 0.0
        %v803 = vmax.f32 %v513, 0.0
        %v804 = vmax.f32 %v587, 0.0
        %v805 = vmax.f32 %v661, 0.0
        %v806 = vmax.f32 %v735, 0.0
        %v807 = vmax.f32 %v516, 0.0
        %v808 = vmax.f32 %v590, 0.0
        %v809 = vmax.f32 %v664, 0.0
        %v810 = vmax.f32 %v738, 0.0
        %v811 = vmax.f32 %v519, 0.0
        %v812 = vmax.f32 %v593, 0.0
        %v813 = vmax.f32 %v667, 0.0
        %v814 = vmax.f32 %v741, 0.0
        %v815 = vmax.f32 %v522, 0.0
        %v816 = vmax.f32 %v596, 0.0
        %v817 = vmax.f32 %v670, 0.0
        %v818 = vmax.f32 %v744, 0.0
        %v819 = vmax.f32 %v525, 0.0
        %v820 = vmax.f32 %v599, 0.0
        %v821 = vmax.f32 %v673, 0.0
        %v822 = vmax.f32 %v747, 0.0
        %v823 = vmax.f32 %v528, 0.0
        %v824 = vmax.f32 %v602, 0.0
        %v825 = vmax.f32 %v676, 0.0
        %v826 = vmax.f32 %v750, 0.0
        %v827 = vmax.f32 %v531, 0.0
        %v828 = vmax.f32 %v605, 0.0
        %v829 = vmax.f32 %v679, 0.0
        %v830 = vmax.f32 %v753, 0.0
        %v831 = vld [vmem:[#allocation2] sm:$0xff]
        %v832 = vld [vmem:[#allocation2 + $0x8] sm:$0xff]
        %v833 = vld [vmem:[#allocation2 + $0x10] sm:$0xff]
        %v834 = vld [vmem:[#allocation2 + $0x18] sm:$0xff]
        %v835 = vld [vmem:[#allocation2 + $0x20] sm:$0xff]
        %v836 = vld [vmem:[#allocation2 + $0x28] sm:$0xff]
        %v837 = vld [vmem:[#allocation2 + $0x30] sm:$0xff]
        %v838 = vld [vmem:[#allocation2 + $0x38] sm:$0xff]
        %v839 = vld [vmem:[#allocation2 + $0x40] sm:$0xff]
        %v840 = vld [vmem:[#allocation2 + $0x48] sm:$0xff]
        %v841 = vld [vmem:[#allocation2 + $0x50] sm:$0xff]
        %v842 = vld [vmem:[#allocation2 + $0x58] sm:$0xff]
        %v843 = vld [vmem:[#allocation2 + $0x60] sm:$0xff]
        %v844 = vld [vmem:[#allocation2 + $0x68] sm:$0xff]
        %v845 = vld [vmem:[#allocation2 + $0x70] sm:$0xff]
        %v846 = vld [vmem:[#allocation2 + $0x78] sm:$0xff]
        %v847 = vld [vmem:[#allocation2 + $0x80] sm:$0xff]
        %v848 = vld [vmem:[#allocation2 + $0x88] sm:$0xff]
        %v849 = vld [vmem:[#allocation2 + $0x90] sm:$0xff]
        %v850 = vld [vmem:[#allocation2 + $0x98] sm:$0xff]
        %v851 = vld [vmem:[#allocation2 + $0xa0] sm:$0xff]
        %v852 = vld [vmem:[#allocation2 + $0xa8] sm:$0xff]
        %v853 = vld [vmem:[#allocation2 + $0xb0] sm:$0xff]
        %v854 = vld [vmem:[#allocation2 + $0xb8] sm:$0xff]
        %v855 = vld [vmem:[#allocation2 + $0xc0] sm:$0xff]
        %v856 = vld [vmem:[#allocation2 + $0xc8] sm:$0xff]
        %v857 = vld [vmem:[#allocation2 + $0xd0] sm:$0xff]
        %v858 = vld [vmem:[#allocation2 + $0xd8] sm:$0xff]
        %v859 = vld [vmem:[#allocation2 + $0xe0] sm:$0xff]
        %v860 = vld [vmem:[#allocation2 + $0xe8] sm:$0xff]
        %v861 = vld [vmem:[#allocation2 + $0xf0] sm:$0xff]
        %v862 = vld [vmem:[#allocation2 + $0xf8] sm:$0xff]
        %v863 = vld [vmem:[#allocation2 + $0x100] sm:$0xff]
        %v864 = vld [vmem:[#allocation2 + $0x108] sm:$0xff]
        %v865 = vld [vmem:[#allocation2 + $0x110] sm:$0xff]
        %v866 = vld [vmem:[#allocation2 + $0x118] sm:$0xff]
        %v867 = vld [vmem:[#allocation2 + $0x120] sm:$0xff]
        %v868 = vld [vmem:[#allocation2 + $0x128] sm:$0xff]
        %v869 = vld [vmem:[#allocation2 + $0x130] sm:$0xff]
        %v870 = vld [vmem:[#allocation2 + $0x138] sm:$0xff]
        %v871 = vld [vmem:[#allocation2 + $0x140] sm:$0xff]
        %v872 = vld [vmem:[#allocation2 + $0x148] sm:$0xff]
        %v873 = vld [vmem:[#allocation2 + $0x150] sm:$0xff]
        %v874 = vld [vmem:[#allocation2 + $0x158] sm:$0xff]
        %v875 = vld [vmem:[#allocation2 + $0x160] sm:$0xff]
        %v876 = vld [vmem:[#allocation2 + $0x168] sm:$0xff]
        %v877 = vld [vmem:[#allocation2 + $0x170] sm:$0xff]
        %v878 = vld [vmem:[#allocation2 + $0x178] sm:$0xff]
        %v879 = vld [vmem:[#allocation2 + $0x180] sm:$0xff]
        %v880 = vld [vmem:[#allocation2 + $0x188] sm:$0xff]
        %v881 = vld [vmem:[#allocation2 + $0x190] sm:$0xff]
        %v882 = vld [vmem:[#allocation2 + $0x198] sm:$0xff]
        %v883 = vld [vmem:[#allocation2 + $0x1a0] sm:$0xff]
        %v884 = vld [vmem:[#allocation2 + $0x1a8] sm:$0xff]
        %v885 = vld [vmem:[#allocation2 + $0x1b0] sm:$0xff]
        %v886 = vld [vmem:[#allocation2 + $0x1b8] sm:$0xff]
        %v887 = vld [vmem:[#allocation2 + $0x1c0] sm:$0xff]
        %v888 = vld [vmem:[#allocation2 + $0x1c8] sm:$0xff]
        %v889 = vld [vmem:[#allocation2 + $0x1d0] sm:$0xff]
        %v890 = vld [vmem:[#allocation2 + $0x1d8] sm:$0xff]
        %v891 = vld [vmem:[#allocation2 + $0x1e0] sm:$0xff]
        %v892 = vld [vmem:[#allocation2 + $0x1e8] sm:$0xff]
        %v893 = vld [vmem:[#allocation2 + $0x1f0] sm:$0xff]
        %v894 = vld [vmem:[#allocation2 + $0x1f8] sm:$0xff]
        %v895 = vld [vmem:[%s4] sm:$0x1]
        %v897 = vperm.slane %v895, 0
        %899 = vmatpush.msra.mxu0 %v846
        %900 = vmatpush.msra.mxu0 %v845
        %901 = vmatpush.msra.mxu0 %v844
        %902 = vmatpush.msra.mxu0 %v843
        %903 = vmatpush.msra.mxu0 %v842
        %904 = vmatpush.msra.mxu0 %v841
        %905 = vmatpush.msra.mxu0 %v840
        %906 = vmatpush.msra.mxu0 %v839
        %907 = vmatpush.msra.mxu0 %v838
        %908 = vmatpush.msra.mxu0 %v837
        %909 = vmatpush.msra.mxu0 %v836
        %910 = vmatpush.msra.mxu0 %v835
        %911 = vmatpush.msra.mxu0 %v834
        %912 = vmatpush.msra.mxu0 %v833
        %913 = vmatpush.msra.mxu0 %v832
        %914 = vmatpush.msra.mxu0 %v831
        %915 = vmatmul.f32.gmra.mxu0 %v755
        %v916 = vpop.f32.mrf.mxu0
        %v917 = vadd.f32 %v897, %v916
        %918 = vmatmul.f32.gmra.mxu0 %v759
        %v919 = vpop.f32.mrf.mxu0
        %v920 = vadd.f32 %v897, %v919
        %921 = vmatmul.f32.gmra.mxu0 %v763
        %v922 = vpop.f32.mrf.mxu0
        %v923 = vadd.f32 %v897, %v922
        %924 = vmatmul.f32.gmra.mxu0 %v767
        %v925 = vpop.f32.mrf.mxu0
        %v926 = vadd.f32 %v897, %v925
        %927 = vmatmul.f32.gmra.mxu0 %v771
        %v928 = vpop.f32.mrf.mxu0
        %v929 = vadd.f32 %v897, %v928
        %930 = vmatmul.f32.gmra.mxu0 %v775
        %v931 = vpop.f32.mrf.mxu0
        %v932 = vadd.f32 %v897, %v931
        %933 = vmatmul.f32.gmra.mxu0 %v779
        %v934 = vpop.f32.mrf.mxu0
        %v935 = vadd.f32 %v897, %v934
        %936 = vmatmul.f32.gmra.mxu0 %v783
        %v937 = vpop.f32.mrf.mxu0
        %v938 = vadd.f32 %v897, %v937
        %939 = vmatmul.f32.gmra.mxu0 %v787
        %v940 = vpop.f32.mrf.mxu0
        %v941 = vadd.f32 %v897, %v940
        %942 = vmatmul.f32.gmra.mxu0 %v791
        %v943 = vpop.f32.mrf.mxu0
        %v944 = vadd.f32 %v897, %v943
        %945 = vmatmul.f32.gmra.mxu0 %v795
        %v946 = vpop.f32.mrf.mxu0
        %v947 = vadd.f32 %v897, %v946
        %948 = vmatmul.f32.gmra.mxu0 %v799
        %v949 = vpop.f32.mrf.mxu0
        %v950 = vadd.f32 %v897, %v949
        %951 = vmatmul.f32.gmra.mxu0 %v803
        %v952 = vpop.f32.mrf.mxu0
        %v953 = vadd.f32 %v897, %v952
        %954 = vmatmul.f32.gmra.mxu0 %v807
        %v955 = vpop.f32.mrf.mxu0
        %v956 = vadd.f32 %v897, %v955
        %957 = vmatmul.f32.gmra.mxu0 %v811
        %v958 = vpop.f32.mrf.mxu0
        %v959 = vadd.f32 %v897, %v958
        %960 = vmatmul.f32.gmra.mxu0 %v815
        %v961 = vpop.f32.mrf.mxu0
        %v962 = vadd.f32 %v897, %v961
        %963 = vmatmul.f32.gmra.mxu0 %v819
        %v964 = vpop.f32.mrf.mxu0
        %v965 = vadd.f32 %v897, %v964
        %966 = vmatmul.f32.gmra.mxu0 %v823
        %v967 = vpop.f32.mrf.mxu0
        %v968 = vadd.f32 %v897, %v967
        %969 = vmatmul.f32.gmra.mxu0 %v827
        %v970 = vpop.f32.mrf.mxu0
        %v971 = vadd.f32 %v897, %v970
        %972 = vdwg.mxu0
        %973 = vmatpush.msra.mxu0 %v862
        %974 = vmatpush.msra.mxu0 %v861
        %975 = vmatpush.msra.mxu0 %v860
        %976 = vmatpush.msra.mxu0 %v859
        %977 = vmatpush.msra.mxu0 %v858
        %978 = vmatpush.msra.mxu0 %v857
        %979 = vmatpush.msra.mxu0 %v856
        %980 = vmatpush.msra.mxu0 %v855
        %981 = vmatpush.msra.mxu0 %v854
        %982 = vmatpush.msra.mxu0 %v853
        %983 = vmatpush.msra.mxu0 %v852
        %984 = vmatpush.msra.mxu0 %v851
        %985 = vmatpush.msra.mxu0 %v850
        %986 = vmatpush.msra.mxu0 %v849
        %987 = vmatpush.msra.mxu0 %v848
        %988 = vmatpush.msra.mxu0 %v847
        %989 = vmatmul.f32.gmra.mxu0 %v756
        %v990 = vpop.f32.mrf.mxu0
        %v991 = vadd.f32 %v917, %v990
        %992 = vmatmul.f32.gmra.mxu0 %v760
        %v993 = vpop.f32.mrf.mxu0
        %v994 = vadd.f32 %v920, %v993
        %995 = vmatmul.f32.gmra.mxu0 %v764
        %v996 = vpop.f32.mrf.mxu0
        %v997 = vadd.f32 %v923, %v996
        %998 = vmatmul.f32.gmra.mxu0 %v768
        %v999 = vpop.f32.mrf.mxu0
        %v1000 = vadd.f32 %v926, %v999
        %1001 = vmatmul.f32.gmra.mxu0 %v772
        %v1002 = vpop.f32.mrf.mxu0
        %v1003 = vadd.f32 %v929, %v1002
        %1004 = vmatmul.f32.gmra.mxu0 %v776
        %v1005 = vpop.f32.mrf.mxu0
        %v1006 = vadd.f32 %v932, %v1005
        %1007 = vmatmul.f32.gmra.mxu0 %v780
        %v1008 = vpop.f32.mrf.mxu0
        %v1009 = vadd.f32 %v935, %v1008
        %1010 = vmatmul.f32.gmra.mxu0 %v784
        %v1011 = vpop.f32.mrf.mxu0
        %v1012 = vadd.f32 %v938, %v1011
        %1013 = vmatmul.f32.gmra.mxu0 %v788
        %v1014 = vpop.f32.mrf.mxu0
        %v1015 = vadd.f32 %v941, %v1014
        %1016 = vmatmul.f32.gmra.mxu0 %v792
        %v1017 = vpop.f32.mrf.mxu0
        %v1018 = vadd.f32 %v944, %v1017
        %1019 = vmatmul.f32.gmra.mxu0 %v796
        %v1020 = vpop.f32.mrf.mxu0
        %v1021 = vadd.f32 %v947, %v1020
        %1022 = vmatmul.f32.gmra.mxu0 %v800
        %v1023 = vpop.f32.mrf.mxu0
        %v1024 = vadd.f32 %v950, %v1023
        %1025 = vmatmul.f32.gmra.mxu0 %v804
        %v1026 = vpop.f32.mrf.mxu0
        %v1027 = vadd.f32 %v953, %v1026
        %1028 = vmatmul.f32.gmra.mxu0 %v808
        %v1029 = vpop.f32.mrf.mxu0
        %v1030 = vadd.f32 %v956, %v1029
        %1031 = vmatmul.f32.gmra.mxu0 %v812
        %v1032 = vpop.f32.mrf.mxu0
        %v1033 = vadd.f32 %v959, %v1032
        %1034 = vmatmul.f32.gmra.mxu0 %v816
        %v1035 = vpop.f32.mrf.mxu0
        %v1036 = vadd.f32 %v962, %v1035
        %1037 = vmatmul.f32.gmra.mxu0 %v820
        %v1038 = vpop.f32.mrf.mxu0
        %v1039 = vadd.f32 %v965, %v1038
        %1040 = vmatmul.f32.gmra.mxu0 %v824
        %v1041 = vpop.f32.mrf.mxu0
        %v1042 = vadd.f32 %v968, %v1041
        %1043 = vmatmul.f32.gmra.mxu0 %v828
        %v1044 = vpop.f32.mrf.mxu0
        %v1045 = vadd.f32 %v971, %v1044
        %1046 = vdwg.mxu0
        %1047 = vmatpush.msra.mxu0 %v878
        %1048 = vmatpush.msra.mxu0 %v877
        %1049 = vmatpush.msra.mxu0 %v876
        %1050 = vmatpush.msra.mxu0 %v875
        %1051 = vmatpush.msra.mxu0 %v874
        %1052 = vmatpush.msra.mxu0 %v873
        %1053 = vmatpush.msra.mxu0 %v872
        %1054 = vmatpush.msra.mxu0 %v871
        %1055 = vmatpush.msra.mxu0 %v870
        %1056 = vmatpush.msra.mxu0 %v869
        %1057 = vmatpush.msra.mxu0 %v868
        %1058 = vmatpush.msra.mxu0 %v867
        %1059 = vmatpush.msra.mxu0 %v866
        %1060 = vmatpush.msra.mxu0 %v865
        %1061 = vmatpush.msra.mxu0 %v864
        %1062 = vmatpush.msra.mxu0 %v863
        %1063 = vmatmul.f32.gmra.mxu0 %v757
        %v1064 = vpop.f32.mrf.mxu0
        %v1065 = vadd.f32 %v991, %v1064
        %1066 = vmatmul.f32.gmra.mxu0 %v761
        %v1067 = vpop.f32.mrf.mxu0
        %v1068 = vadd.f32 %v994, %v1067
        %1069 = vmatmul.f32.gmra.mxu0 %v765
        %v1070 = vpop.f32.mrf.mxu0
        %v1071 = vadd.f32 %v997, %v1070
        %1072 = vmatmul.f32.gmra.mxu0 %v769
        %v1073 = vpop.f32.mrf.mxu0
        %v1074 = vadd.f32 %v1000, %v1073
        %1075 = vmatmul.f32.gmra.mxu0 %v773
        %v1076 = vpop.f32.mrf.mxu0
        %v1077 = vadd.f32 %v1003, %v1076
        %1078 = vmatmul.f32.gmra.mxu0 %v777
        %v1079 = vpop.f32.mrf.mxu0
        %v1080 = vadd.f32 %v1006, %v1079
        %1081 = vmatmul.f32.gmra.mxu0 %v781
        %v1082 = vpop.f32.mrf.mxu0
        %v1083 = vadd.f32 %v1009, %v1082
        %1084 = vmatmul.f32.gmra.mxu0 %v785
        %v1085 = vpop.f32.mrf.mxu0
        %v1086 = vadd.f32 %v1012, %v1085
        %1087 = vmatmul.f32.gmra.mxu0 %v789
        %v1088 = vpop.f32.mrf.mxu0
        %v1089 = vadd.f32 %v1015, %v1088
        %1090 = vmatmul.f32.gmra.mxu0 %v793
        %v1091 = vpop.f32.mrf.mxu0
        %v1092 = vadd.f32 %v1018, %v1091
        %1093 = vmatmul.f32.gmra.mxu0 %v797
        %v1094 = vpop.f32.mrf.mxu0
        %v1095 = vadd.f32 %v1021, %v1094
        %1096 = vmatmul.f32.gmra.mxu0 %v801
        %v1097 = vpop.f32.mrf.mxu0
        %v1098 = vadd.f32 %v1024, %v1097
        %1099 = vmatmul.f32.gmra.mxu0 %v805
        %v1100 = vpop.f32.mrf.mxu0
        %v1101 = vadd.f32 %v1027, %v1100
        %1102 = vmatmul.f32.gmra.mxu0 %v809
        %v1103 = vpop.f32.mrf.mxu0
        %v1104 = vadd.f32 %v1030, %v1103
        %1105 = vmatmul.f32.gmra.mxu0 %v813
        %v1106 = vpop.f32.mrf.mxu0
        %v1107 = vadd.f32 %v1033, %v1106
        %1108 = vmatmul.f32.gmra.mxu0 %v817
        %v1109 = vpop.f32.mrf.mxu0
        %v1110 = vadd.f32 %v1036, %v1109
        %1111 = vmatmul.f32.gmra.mxu0 %v821
        %v1112 = vpop.f32.mrf.mxu0
        %v1113 = vadd.f32 %v1039, %v1112
        %1114 = vmatmul.f32.gmra.mxu0 %v825
        %v1115 = vpop.f32.mrf.mxu0
        %v1116 = vadd.f32 %v1042, %v1115
        %1117 = vmatmul.f32.gmra.mxu0 %v829
        %v1118 = vpop.f32.mrf.mxu0
        %v1119 = vadd.f32 %v1045, %v1118
        %1120 = vdwg.mxu0
        %1121 = vmatpush.msra.mxu0 %v894
        %1122 = vmatpush.msra.mxu0 %v893
        %1123 = vmatpush.msra.mxu0 %v892
        %1124 = vmatpush.msra.mxu0 %v891
        %1125 = vmatpush.msra.mxu0 %v890
        %1126 = vmatpush.msra.mxu0 %v889
        %1127 = vmatpush.msra.mxu0 %v888
        %1128 = vmatpush.msra.mxu0 %v887
        %1129 = vmatpush.msra.mxu0 %v886
        %1130 = vmatpush.msra.mxu0 %v885
        %1131 = vmatpush.msra.mxu0 %v884
        %1132 = vmatpush.msra.mxu0 %v883
        %1133 = vmatpush.msra.mxu0 %v882
        %1134 = vmatpush.msra.mxu0 %v881
        %1135 = vmatpush.msra.mxu0 %v880
        %1136 = vmatpush.msra.mxu0 %v879
        %1137 = vmatmul.f32.gmra.mxu0 %v758
        %v1138 = vpop.f32.mrf.mxu0
        %v1139 = vadd.f32 %v1065, %v1138
        %1140 = vmatmul.f32.gmra.mxu0 %v762
        %v1141 = vpop.f32.mrf.mxu0
        %v1142 = vadd.f32 %v1068, %v1141
        %1143 = vmatmul.f32.gmra.mxu0 %v766
        %v1144 = vpop.f32.mrf.mxu0
        %v1145 = vadd.f32 %v1071, %v1144
        %1146 = vmatmul.f32.gmra.mxu0 %v770
        %v1147 = vpop.f32.mrf.mxu0
        %v1148 = vadd.f32 %v1074, %v1147
        %1149 = vmatmul.f32.gmra.mxu0 %v774
        %v1150 = vpop.f32.mrf.mxu0
        %v1151 = vadd.f32 %v1077, %v1150
        %1152 = vmatmul.f32.gmra.mxu0 %v778
        %v1153 = vpop.f32.mrf.mxu0
        %v1154 = vadd.f32 %v1080, %v1153
        %1155 = vmatmul.f32.gmra.mxu0 %v782
        %v1156 = vpop.f32.mrf.mxu0
        %v1157 = vadd.f32 %v1083, %v1156
        %1158 = vmatmul.f32.gmra.mxu0 %v786
        %v1159 = vpop.f32.mrf.mxu0
        %v1160 = vadd.f32 %v1086, %v1159
        %1161 = vmatmul.f32.gmra.mxu0 %v790
        %v1162 = vpop.f32.mrf.mxu0
        %v1163 = vadd.f32 %v1089, %v1162
        %1164 = vmatmul.f32.gmra.mxu0 %v794
        %v1165 = vpop.f32.mrf.mxu0
        %v1166 = vadd.f32 %v1092, %v1165
        %1167 = vmatmul.f32.gmra.mxu0 %v798
        %v1168 = vpop.f32.mrf.mxu0
        %v1169 = vadd.f32 %v1095, %v1168
        %1170 = vmatmul.f32.gmra.mxu0 %v802
        %v1171 = vpop.f32.mrf.mxu0
        %v1172 = vadd.f32 %v1098, %v1171
        %1173 = vmatmul.f32.gmra.mxu0 %v806
        %v1174 = vpop.f32.mrf.mxu0
        %v1175 = vadd.f32 %v1101, %v1174
        %1176 = vmatmul.f32.gmra.mxu0 %v810
        %v1177 = vpop.f32.mrf.mxu0
        %v1178 = vadd.f32 %v1104, %v1177
        %1179 = vmatmul.f32.gmra.mxu0 %v814
        %v1180 = vpop.f32.mrf.mxu0
        %v1181 = vadd.f32 %v1107, %v1180
        %1182 = vmatmul.f32.gmra.mxu0 %v818
        %v1183 = vpop.f32.mrf.mxu0
        %v1184 = vadd.f32 %v1110, %v1183
        %1185 = vmatmul.f32.gmra.mxu0 %v822
        %v1186 = vpop.f32.mrf.mxu0
        %v1187 = vadd.f32 %v1113, %v1186
        %1188 = vmatmul.f32.gmra.mxu0 %v826
        %v1189 = vpop.f32.mrf.mxu0
        %v1190 = vadd.f32 %v1116, %v1189
        %1191 = vmatmul.f32.gmra.mxu0 %v830
        %v1192 = vpop.f32.mrf.mxu0
        %v1193 = vadd.f32 %v1119, %v1192
        %1194 = vdwg.mxu0
        %v1195 = vmax.f32 %v1139, 0.0
        %v1196 = vmax.f32 %v1142, 0.0
        %v1197 = vmax.f32 %v1145, 0.0
        %v1198 = vmax.f32 %v1148, 0.0
        %v1199 = vmax.f32 %v1151, 0.0
        %v1200 = vmax.f32 %v1154, 0.0
        %v1201 = vmax.f32 %v1157, 0.0
        %v1202 = vmax.f32 %v1160, 0.0
        %v1203 = vmax.f32 %v1163, 0.0
        %v1204 = vmax.f32 %v1166, 0.0
        %v1205 = vmax.f32 %v1169, 0.0
        %v1206 = vmax.f32 %v1172, 0.0
        %v1207 = vmax.f32 %v1175, 0.0
        %v1208 = vmax.f32 %v1178, 0.0
        %v1209 = vmax.f32 %v1181, 0.0
        %v1210 = vmax.f32 %v1184, 0.0
        %v1211 = vmax.f32 %v1187, 0.0
        %v1212 = vmax.f32 %v1190, 0.0
        %v1213 = vmax.f32 %v1193, 0.0
        %v1214 = vld [vmem:[%s5] sm:$0xff]
        %v1215 = vld [vmem:[%s5 + $0x8] sm:$0xff]
        %v1216 = vld [vmem:[%s5 + $0x10] sm:$0xff]
        %v1217 = vld [vmem:[%s5 + $0x18] sm:$0xff]
        %v1218 = vld [vmem:[%s5 + $0x20] sm:$0xff]
        %v1219 = vld [vmem:[%s5 + $0x28] sm:$0xff]
        %v1220 = vld [vmem:[%s5 + $0x30] sm:$0xff]
        %v1221 = vld [vmem:[%s5 + $0x38] sm:$0xff]
        %v1222 = vld [vmem:[%s5 + $0x40] sm:$0xff]
        %v1223 = vld [vmem:[%s5 + $0x48] sm:$0xff]
        %v1224 = vld [vmem:[%s5 + $0x50] sm:$0xff]
        %v1225 = vld [vmem:[%s5 + $0x58] sm:$0xff]
        %v1226 = vld [vmem:[%s5 + $0x60] sm:$0xff]
        %v1227 = vld [vmem:[%s5 + $0x68] sm:$0xff]
        %v1228 = vld [vmem:[%s5 + $0x70] sm:$0xff]
        %v1229 = vld [vmem:[%s5 + $0x78] sm:$0xff]
        %v1230 = vld [vmem:[%s6] sm:$0x1]
        %v1232 = vperm.slane %v1230, 0
        %1234 = vmatpush.msra.mxu0 %v1229
        %1235 = vmatpush.msra.mxu0 %v1228
        %1236 = vmatpush.msra.mxu0 %v1227
        %1237 = vmatpush.msra.mxu0 %v1226
        %1238 = vmatpush.msra.mxu0 %v1225
        %1239 = vmatpush.msra.mxu0 %v1224
        %1240 = vmatpush.msra.mxu0 %v1223
        %1241 = vmatpush.msra.mxu0 %v1222
        %1242 = vmatpush.msra.mxu0 %v1221
        %1243 = vmatpush.msra.mxu0 %v1220
        %1244 = vmatpush.msra.mxu0 %v1219
        %1245 = vmatpush.msra.mxu0 %v1218
        %1246 = vmatpush.msra.mxu0 %v1217
        %1247 = vmatpush.msra.mxu0 %v1216
        %1248 = vmatpush.msra.mxu0 %v1215
        %1249 = vmatpush.msra.mxu0 %v1214
        %1250 = vmatmul.f32.gmra.mxu0 %v1195
        %v1251 = vpop.f32.mrf.mxu0
        %v1252 = vadd.f32 %v1232, %v1251
        %1253 = vmatmul.f32.gmra.mxu0 %v1196
        %v1254 = vpop.f32.mrf.mxu0
        %v1255 = vadd.f32 %v1232, %v1254
        %1256 = vmatmul.f32.gmra.mxu0 %v1197
        %v1257 = vpop.f32.mrf.mxu0
        %v1258 = vadd.f32 %v1232, %v1257
        %1259 = vmatmul.f32.gmra.mxu0 %v1198
        %v1260 = vpop.f32.mrf.mxu0
        %v1261 = vadd.f32 %v1232, %v1260
        %1262 = vmatmul.f32.gmra.mxu0 %v1199
        %v1263 = vpop.f32.mrf.mxu0
        %v1264 = vadd.f32 %v1232, %v1263
        %1265 = vmatmul.f32.gmra.mxu0 %v1200
        %v1266 = vpop.f32.mrf.mxu0
        %v1267 = vadd.f32 %v1232, %v1266
        %1268 = vmatmul.f32.gmra.mxu0 %v1201
        %v1269 = vpop.f32.mrf.mxu0
        %v1270 = vadd.f32 %v1232, %v1269
        %1271 = vmatmul.f32.gmra.mxu0 %v1202
        %v1272 = vpop.f32.mrf.mxu0
        %v1273 = vadd.f32 %v1232, %v1272
        %1274 = vmatmul.f32.gmra.mxu0 %v1203
        %v1275 = vpop.f32.mrf.mxu0
        %v1276 = vadd.f32 %v1232, %v1275
        %1277 = vmatmul.f32.gmra.mxu0 %v1204
        %v1278 = vpop.f32.mrf.mxu0
        %v1279 = vadd.f32 %v1232, %v1278
        %1280 = vmatmul.f32.gmra.mxu0 %v1205
        %v1281 = vpop.f32.mrf.mxu0
        %v1282 = vadd.f32 %v1232, %v1281
        %1283 = vmatmul.f32.gmra.mxu0 %v1206
        %v1284 = vpop.f32.mrf.mxu0
        %v1285 = vadd.f32 %v1232, %v1284
        %1286 = vmatmul.f32.gmra.mxu0 %v1207
        %v1287 = vpop.f32.mrf.mxu0
        %v1288 = vadd.f32 %v1232, %v1287
        %1289 = vmatmul.f32.gmra.mxu0 %v1208
        %v1290 = vpop.f32.mrf.mxu0
        %v1291 = vadd.f32 %v1232, %v1290
        %1292 = vmatmul.f32.gmra.mxu0 %v1209
        %v1293 = vpop.f32.mrf.mxu0
        %v1294 = vadd.f32 %v1232, %v1293
        %1295 = vmatmul.f32.gmra.mxu0 %v1210
        %v1296 = vpop.f32.mrf.mxu0
        %v1297 = vadd.f32 %v1232, %v1296
        %1298 = vmatmul.f32.gmra.mxu0 %v1211
        %v1299 = vpop.f32.mrf.mxu0
        %v1300 = vadd.f32 %v1232, %v1299
        %1301 = vmatmul.f32.gmra.mxu0 %v1212
        %v1302 = vpop.f32.mrf.mxu0
        %v1303 = vadd.f32 %v1232, %v1302
        %1304 = vmatmul.f32.gmra.mxu0 %v1213
        %v1305 = vpop.f32.mrf.mxu0
        %v1306 = vadd.f32 %v1232, %v1305
        %1307 = vdwg.mxu0
        %v1308 = vmax.f32 %v1252, 0.0
        %v1309 = vmax.f32 %v1255, 0.0
        %v1310 = vmax.f32 %v1258, 0.0
        %v1311 = vmax.f32 %v1261, 0.0
        %v1312 = vmax.f32 %v1264, 0.0
        %v1313 = vmax.f32 %v1267, 0.0
        %v1314 = vmax.f32 %v1270, 0.0
        %v1315 = vmax.f32 %v1273, 0.0
        %v1316 = vmax.f32 %v1276, 0.0
        %v1317 = vmax.f32 %v1279, 0.0
        %v1318 = vmax.f32 %v1282, 0.0
        %v1319 = vmax.f32 %v1285, 0.0
        %v1320 = vmax.f32 %v1288, 0.0
        %v1321 = vmax.f32 %v1291, 0.0
        %v1322 = vmax.f32 %v1294, 0.0
        %v1323 = vmax.f32 %v1297, 0.0
        %v1324 = vmax.f32 %v1300, 0.0
        %v1325 = vmax.f32 %v1303, 0.0
        %v1326 = vmax.f32 %v1306, 0.0
        %v1327 = vld [vmem:[%s7] sm:$0xff]
        %v1328 = vld [vmem:[%s7 + $0x8] sm:$0xff]
        %v1329 = vld [vmem:[%s7 + $0x10] sm:$0xff]
        %v1330 = vld [vmem:[%s7 + $0x18] sm:$0xff]
        %v1331 = vld [vmem:[%s7 + $0x20] sm:$0xff]
        %v1332 = vld [vmem:[%s7 + $0x28] sm:$0xff]
        %v1333 = vld [vmem:[%s7 + $0x30] sm:$0xff]
        %v1334 = vld [vmem:[%s7 + $0x38] sm:$0xff]
        %v1335 = vld [vmem:[%s7 + $0x40] sm:$0xff]
        %v1336 = vld [vmem:[%s7 + $0x48] sm:$0xff]
        %v1337 = vld [vmem:[%s7 + $0x50] sm:$0xff]
        %v1338 = vld [vmem:[%s7 + $0x58] sm:$0xff]
        %v1339 = vld [vmem:[%s7 + $0x60] sm:$0xff]
        %v1340 = vld [vmem:[%s7 + $0x68] sm:$0xff]
        %v1341 = vld [vmem:[%s7 + $0x70] sm:$0xff]
        %v1342 = vld [vmem:[%s7 + $0x78] sm:$0xff]
        %v1343 = vld [vmem:[%s8] sm:$0x1]
        %v1345 = vperm.slane %v1343, 0
        %1347 = vmatpush.msra.mxu0 %v1342
        %1348 = vmatpush.msra.mxu0 %v1341
        %1349 = vmatpush.msra.mxu0 %v1340
        %1350 = vmatpush.msra.mxu0 %v1339
        %1351 = vmatpush.msra.mxu0 %v1338
        %1352 = vmatpush.msra.mxu0 %v1337
        %1353 = vmatpush.msra.mxu0 %v1336
        %1354 = vmatpush.msra.mxu0 %v1335
        %1355 = vmatpush.msra.mxu0 %v1334
        %1356 = vmatpush.msra.mxu0 %v1333
        %1357 = vmatpush.msra.mxu0 %v1332
        %1358 = vmatpush.msra.mxu0 %v1331
        %1359 = vmatpush.msra.mxu0 %v1330
        %1360 = vmatpush.msra.mxu0 %v1329
        %1361 = vmatpush.msra.mxu0 %v1328
        %1362 = vmatpush.msra.mxu0 %v1327
        %1363 = vmatmul.f32.gmra.mxu0 %v1308
        %v1364 = vpop.f32.mrf.mxu0
        %v1365 = vadd.f32 %v1345, %v1364
        %1366 = vmatmul.f32.gmra.mxu0 %v1309
        %v1367 = vpop.f32.mrf.mxu0
        %v1368 = vadd.f32 %v1345, %v1367
        %1369 = vmatmul.f32.gmra.mxu0 %v1310
        %v1370 = vpop.f32.mrf.mxu0
        %v1371 = vadd.f32 %v1345, %v1370
        %1372 = vmatmul.f32.gmra.mxu0 %v1311
        %v1373 = vpop.f32.mrf.mxu0
        %v1374 = vadd.f32 %v1345, %v1373
        %1375 = vmatmul.f32.gmra.mxu0 %v1312
        %v1376 = vpop.f32.mrf.mxu0
        %v1377 = vadd.f32 %v1345, %v1376
        %1378 = vmatmul.f32.gmra.mxu0 %v1313
        %v1379 = vpop.f32.mrf.mxu0
        %v1380 = vadd.f32 %v1345, %v1379
        %1381 = vmatmul.f32.gmra.mxu0 %v1314
        %v1382 = vpop.f32.mrf.mxu0
        %v1383 = vadd.f32 %v1345, %v1382
        %1384 = vmatmul.f32.gmra.mxu0 %v1315
        %v1385 = vpop.f32.mrf.mxu0
        %v1386 = vadd.f32 %v1345, %v1385
        %1387 = vmatmul.f32.gmra.mxu0 %v1316
        %v1388 = vpop.f32.mrf.mxu0
        %v1389 = vadd.f32 %v1345, %v1388
        %1390 = vmatmul.f32.gmra.mxu0 %v1317
        %v1391 = vpop.f32.mrf.mxu0
        %v1392 = vadd.f32 %v1345, %v1391
        %1393 = vmatmul.f32.gmra.mxu0 %v1318
        %v1394 = vpop.f32.mrf.mxu0
        %v1395 = vadd.f32 %v1345, %v1394
        %1396 = vmatmul.f32.gmra.mxu0 %v1319
        %v1397 = vpop.f32.mrf.mxu0
        %v1398 = vadd.f32 %v1345, %v1397
        %1399 = vmatmul.f32.gmra.mxu0 %v1320
        %v1400 = vpop.f32.mrf.mxu0
        %v1401 = vadd.f32 %v1345, %v1400
        %1402 = vmatmul.f32.gmra.mxu0 %v1321
        %v1403 = vpop.f32.mrf.mxu0
        %v1404 = vadd.f32 %v1345, %v1403
        %1405 = vmatmul.f32.gmra.mxu0 %v1322
        %v1406 = vpop.f32.mrf.mxu0
        %v1407 = vadd.f32 %v1345, %v1406
        %1408 = vmatmul.f32.gmra.mxu0 %v1323
        %v1409 = vpop.f32.mrf.mxu0
        %v1410 = vadd.f32 %v1345, %v1409
        %1411 = vmatmul.f32.gmra.mxu0 %v1324
        %v1412 = vpop.f32.mrf.mxu0
        %v1413 = vadd.f32 %v1345, %v1412
        %1414 = vmatmul.f32.gmra.mxu0 %v1325
        %v1415 = vpop.f32.mrf.mxu0
        %v1416 = vadd.f32 %v1345, %v1415
        %1417 = vmatmul.f32.gmra.mxu0 %v1326
        %v1418 = vpop.f32.mrf.mxu0
        %v1419 = vadd.f32 %v1345, %v1418
        %1420 = vdwg.mxu0
        %v1421 = vxor.u32 %v1365, 2147483648
        %v1422 = vxor.u32 %v1368, 2147483648
        %v1423 = vxor.u32 %v1371, 2147483648
        %v1424 = vxor.u32 %v1374, 2147483648
        %v1425 = vxor.u32 %v1377, 2147483648
        %v1426 = vxor.u32 %v1380, 2147483648
        %v1427 = vxor.u32 %v1383, 2147483648
        %v1428 = vxor.u32 %v1386, 2147483648
        %v1429 = vxor.u32 %v1389, 2147483648
        %v1430 = vxor.u32 %v1392, 2147483648
        %v1431 = vxor.u32 %v1395, 2147483648
        %v1432 = vxor.u32 %v1398, 2147483648
        %v1433 = vxor.u32 %v1401, 2147483648
        %v1434 = vxor.u32 %v1404, 2147483648
        %v1435 = vxor.u32 %v1407, 2147483648
        %v1436 = vxor.u32 %v1410, 2147483648
        %v1437 = vxor.u32 %v1413, 2147483648
        %v1438 = vxor.u32 %v1416, 2147483648
        %v1439 = vxor.u32 %v1419, 2147483648
        %v1440 = vmul.f32 %v1421, 1.442695
        %v1441 = vpow.pop %v1440
        %v1442 = vmul.f32 %v1422, 1.442695
        %v1443 = vpow.pop %v1442
        %v1444 = vmul.f32 %v1423, 1.442695
        %v1445 = vpow.pop %v1444
        %v1446 = vmul.f32 %v1424, 1.442695
        %v1447 = vpow.pop %v1446
        %v1448 = vmul.f32 %v1425, 1.442695
        %v1449 = vpow.pop %v1448
        %v1450 = vmul.f32 %v1426, 1.442695
        %v1451 = vpow.pop %v1450
        %v1452 = vmul.f32 %v1427, 1.442695
        %v1453 = vpow.pop %v1452
        %v1454 = vmul.f32 %v1428, 1.442695
        %v1455 = vpow.pop %v1454
        %v1456 = vmul.f32 %v1429, 1.442695
        %v1457 = vpow.pop %v1456
        %v1458 = vmul.f32 %v1430, 1.442695
        %v1459 = vpow.pop %v1458
        %v1460 = vmul.f32 %v1431, 1.442695
        %v1461 = vpow.pop %v1460
        %v1462 = vmul.f32 %v1432, 1.442695
        %v1463 = vpow.pop %v1462
        %v1464 = vmul.f32 %v1433, 1.442695
        %v1465 = vpow.pop %v1464
        %v1466 = vmul.f32 %v1434, 1.442695
        %v1467 = vpow.pop %v1466
        %v1468 = vmul.f32 %v1435, 1.442695
        %v1469 = vpow.pop %v1468
        %v1470 = vmul.f32 %v1436, 1.442695
        %v1471 = vpow.pop %v1470
        %v1472 = vmul.f32 %v1437, 1.442695
        %v1473 = vpow.pop %v1472
        %v1474 = vmul.f32 %v1438, 1.442695
        %v1475 = vpow.pop %v1474
        %v1476 = vmul.f32 %v1439, 1.442695
        %v1477 = vpow.pop %v1476
        %v1478 = vadd.f32 %v1441, 1.0
        %v1479 = vadd.f32 %v1443, 1.0
        %v1480 = vadd.f32 %v1445, 1.0
        %v1481 = vadd.f32 %v1447, 1.0
        %v1482 = vadd.f32 %v1449, 1.0
        %v1483 = vadd.f32 %v1451, 1.0
        %v1484 = vadd.f32 %v1453, 1.0
        %v1485 = vadd.f32 %v1455, 1.0
        %v1486 = vadd.f32 %v1457, 1.0
        %v1487 = vadd.f32 %v1459, 1.0
        %v1488 = vadd.f32 %v1461, 1.0
        %v1489 = vadd.f32 %v1463, 1.0
        %v1490 = vadd.f32 %v1465, 1.0
        %v1491 = vadd.f32 %v1467, 1.0
        %v1492 = vadd.f32 %v1469, 1.0
        %v1493 = vadd.f32 %v1471, 1.0
        %v1494 = vadd.f32 %v1473, 1.0
        %v1495 = vadd.f32 %v1475, 1.0
        %v1496 = vadd.f32 %v1477, 1.0
        %v1497 = vrcp.pop %v1478
        %v1498 = vmul.f32 %v1478, %v1497
        %v1499 = vsub.f32 1.0, %v1498
        %v1500 = vmul.f32 %v1497, %v1499
        %v1501 = vadd.f32 %v1497, %v1500
        %vm1502 = vweird.f32 %v1478
        %vm1503 = vweird.f32 %v1497
        %vm1504 = vmor %vm1502, %vm1503
        %v1505 = vsel %vm1504, %v1497, %v1501
        %v1506 = vand.u32 2147483647, %v1478
        %vm1507 = vcmp.eq.f32.partialorder %v1506, 8.507059e+37
        %v1508 = vand.u32 %v1478, 2147483648
        %v1509 = vor.u32 1.1754944e-38, %v1508
        %v1510 = vsel %vm1507, %v1509, %v1505
        %v1511 = vmul.f32 1.0, %v1510
        %v1512 = vrcp.pop %v1479
        %v1513 = vmul.f32 %v1479, %v1512
        %v1514 = vsub.f32 1.0, %v1513
        %v1515 = vmul.f32 %v1512, %v1514
        %v1516 = vadd.f32 %v1512, %v1515
        %vm1517 = vweird.f32 %v1479
        %vm1518 = vweird.f32 %v1512
        %vm1519 = vmor %vm1517, %vm1518
        %v1520 = vsel %vm1519, %v1512, %v1516
        %v1521 = vand.u32 2147483647, %v1479
        %vm1522 = vcmp.eq.f32.partialorder %v1521, 8.507059e+37
        %v1523 = vand.u32 %v1479, 2147483648
        %v1524 = vor.u32 1.1754944e-38, %v1523
        %v1525 = vsel %vm1522, %v1524, %v1520
        %v1526 = vmul.f32 1.0, %v1525
        %v1527 = vrcp.pop %v1480
        %v1528 = vmul.f32 %v1480, %v1527
        %v1529 = vsub.f32 1.0, %v1528
        %v1530 = vmul.f32 %v1527, %v1529
        %v1531 = vadd.f32 %v1527, %v1530
        %vm1532 = vweird.f32 %v1480
        %vm1533 = vweird.f32 %v1527
        %vm1534 = vmor %vm1532, %vm1533
        %v1535 = vsel %vm1534, %v1527, %v1531
        %v1536 = vand.u32 2147483647, %v1480
        %vm1537 = vcmp.eq.f32.partialorder %v1536, 8.507059e+37
        %v1538 = vand.u32 %v1480, 2147483648
        %v1539 = vor.u32 1.1754944e-38, %v1538
        %v1540 = vsel %vm1537, %v1539, %v1535
        %v1541 = vmul.f32 1.0, %v1540
        %v1542 = vrcp.pop %v1481
        %v1543 = vmul.f32 %v1481, %v1542
        %v1544 = vsub.f32 1.0, %v1543
        %v1545 = vmul.f32 %v1542, %v1544
        %v1546 = vadd.f32 %v1542, %v1545
        %vm1547 = vweird.f32 %v1481
        %vm1548 = vweird.f32 %v1542
        %vm1549 = vmor %vm1547, %vm1548
        %v1550 = vsel %vm1549, %v1542, %v1546
        %v1551 = vand.u32 2147483647, %v1481
        %vm1552 = vcmp.eq.f32.partialorder %v1551, 8.507059e+37
        %v1553 = vand.u32 %v1481, 2147483648
        %v1554 = vor.u32 1.1754944e-38, %v1553
        %v1555 = vsel %vm1552, %v1554, %v1550
        %v1556 = vmul.f32 1.0, %v1555
        %v1557 = vrcp.pop %v1482
        %v1558 = vmul.f32 %v1482, %v1557
        %v1559 = vsub.f32 1.0, %v1558
        %v1560 = vmul.f32 %v1557, %v1559
        %v1561 = vadd.f32 %v1557, %v1560
        %vm1562 = vweird.f32 %v1482
        %vm1563 = vweird.f32 %v1557
        %vm1564 = vmor %vm1562, %vm1563
        %v1565 = vsel %vm1564, %v1557, %v1561
        %v1566 = vand.u32 2147483647, %v1482
        %vm1567 = vcmp.eq.f32.partialorder %v1566, 8.507059e+37
        %v1568 = vand.u32 %v1482, 2147483648
        %v1569 = vor.u32 1.1754944e-38, %v1568
        %v1570 = vsel %vm1567, %v1569, %v1565
        %v1571 = vmul.f32 1.0, %v1570
        %v1572 = vrcp.pop %v1483
        %v1573 = vmul.f32 %v1483, %v1572
        %v1574 = vsub.f32 1.0, %v1573
        %v1575 = vmul.f32 %v1572, %v1574
        %v1576 = vadd.f32 %v1572, %v1575
        %vm1577 = vweird.f32 %v1483
        %vm1578 = vweird.f32 %v1572
        %vm1579 = vmor %vm1577, %vm1578
        %v1580 = vsel %vm1579, %v1572, %v1576
        %v1581 = vand.u32 2147483647, %v1483
        %vm1582 = vcmp.eq.f32.partialorder %v1581, 8.507059e+37
        %v1583 = vand.u32 %v1483, 2147483648
        %v1584 = vor.u32 1.1754944e-38, %v1583
        %v1585 = vsel %vm1582, %v1584, %v1580
        %v1586 = vmul.f32 1.0, %v1585
        %v1587 = vrcp.pop %v1484
        %v1588 = vmul.f32 %v1484, %v1587
        %v1589 = vsub.f32 1.0, %v1588
        %v1590 = vmul.f32 %v1587, %v1589
        %v1591 = vadd.f32 %v1587, %v1590
        %vm1592 = vweird.f32 %v1484
        %vm1593 = vweird.f32 %v1587
        %vm1594 = vmor %vm1592, %vm1593
        %v1595 = vsel %vm1594, %v1587, %v1591
        %v1596 = vand.u32 2147483647, %v1484
        %vm1597 = vcmp.eq.f32.partialorder %v1596, 8.507059e+37
        %v1598 = vand.u32 %v1484, 2147483648
        %v1599 = vor.u32 1.1754944e-38, %v1598
        %v1600 = vsel %vm1597, %v1599, %v1595
        %v1601 = vmul.f32 1.0, %v1600
        %v1602 = vrcp.pop %v1485
        %v1603 = vmul.f32 %v1485, %v1602
        %v1604 = vsub.f32 1.0, %v1603
        %v1605 = vmul.f32 %v1602, %v1604
        %v1606 = vadd.f32 %v1602, %v1605
        %vm1607 = vweird.f32 %v1485
        %vm1608 = vweird.f32 %v1602
        %vm1609 = vmor %vm1607, %vm1608
        %v1610 = vsel %vm1609, %v1602, %v1606
        %v1611 = vand.u32 2147483647, %v1485
        %vm1612 = vcmp.eq.f32.partialorder %v1611, 8.507059e+37
        %v1613 = vand.u32 %v1485, 2147483648
        %v1614 = vor.u32 1.1754944e-38, %v1613
        %v1615 = vsel %vm1612, %v1614, %v1610
        %v1616 = vmul.f32 1.0, %v1615
        %v1617 = vrcp.pop %v1486
        %v1618 = vmul.f32 %v1486, %v1617
        %v1619 = vsub.f32 1.0, %v1618
        %v1620 = vmul.f32 %v1617, %v1619
        %v1621 = vadd.f32 %v1617, %v1620
        %vm1622 = vweird.f32 %v1486
        %vm1623 = vweird.f32 %v1617
        %vm1624 = vmor %vm1622, %vm1623
        %v1625 = vsel %vm1624, %v1617, %v1621
        %v1626 = vand.u32 2147483647, %v1486
        %vm1627 = vcmp.eq.f32.partialorder %v1626, 8.507059e+37
        %v1628 = vand.u32 %v1486, 2147483648
        %v1629 = vor.u32 1.1754944e-38, %v1628
        %v1630 = vsel %vm1627, %v1629, %v1625
        %v1631 = vmul.f32 1.0, %v1630
        %v1632 = vrcp.pop %v1487
        %v1633 = vmul.f32 %v1487, %v1632
        %v1634 = vsub.f32 1.0, %v1633
        %v1635 = vmul.f32 %v1632, %v1634
        %v1636 = vadd.f32 %v1632, %v1635
        %vm1637 = vweird.f32 %v1487
        %vm1638 = vweird.f32 %v1632
        %vm1639 = vmor %vm1637, %vm1638
        %v1640 = vsel %vm1639, %v1632, %v1636
        %v1641 = vand.u32 2147483647, %v1487
        %vm1642 = vcmp.eq.f32.partialorder %v1641, 8.507059e+37
        %v1643 = vand.u32 %v1487, 2147483648
        %v1644 = vor.u32 1.1754944e-38, %v1643
        %v1645 = vsel %vm1642, %v1644, %v1640
        %v1646 = vmul.f32 1.0, %v1645
        %v1647 = vrcp.pop %v1488
        %v1648 = vmul.f32 %v1488, %v1647
        %v1649 = vsub.f32 1.0, %v1648
        %v1650 = vmul.f32 %v1647, %v1649
        %v1651 = vadd.f32 %v1647, %v1650
        %vm1652 = vweird.f32 %v1488
        %vm1653 = vweird.f32 %v1647
        %vm1654 = vmor %vm1652, %vm1653
        %v1655 = vsel %vm1654, %v1647, %v1651
        %v1656 = vand.u32 2147483647, %v1488
        %vm1657 = vcmp.eq.f32.partialorder %v1656, 8.507059e+37
        %v1658 = vand.u32 %v1488, 2147483648
        %v1659 = vor.u32 1.1754944e-38, %v1658
        %v1660 = vsel %vm1657, %v1659, %v1655
        %v1661 = vmul.f32 1.0, %v1660
        %v1662 = vrcp.pop %v1489
        %v1663 = vmul.f32 %v1489, %v1662
        %v1664 = vsub.f32 1.0, %v1663
        %v1665 = vmul.f32 %v1662, %v1664
        %v1666 = vadd.f32 %v1662, %v1665
        %vm1667 = vweird.f32 %v1489
        %vm1668 = vweird.f32 %v1662
        %vm1669 = vmor %vm1667, %vm1668
        %v1670 = vsel %vm1669, %v1662, %v1666
        %v1671 = vand.u32 2147483647, %v1489
        %vm1672 = vcmp.eq.f32.partialorder %v1671, 8.507059e+37
        %v1673 = vand.u32 %v1489, 2147483648
        %v1674 = vor.u32 1.1754944e-38, %v1673
        %v1675 = vsel %vm1672, %v1674, %v1670
        %v1676 = vmul.f32 1.0, %v1675
        %v1677 = vrcp.pop %v1490
        %v1678 = vmul.f32 %v1490, %v1677
        %v1679 = vsub.f32 1.0, %v1678
        %v1680 = vmul.f32 %v1677, %v1679
        %v1681 = vadd.f32 %v1677, %v1680
        %vm1682 = vweird.f32 %v1490
        %vm1683 = vweird.f32 %v1677
        %vm1684 = vmor %vm1682, %vm1683
        %v1685 = vsel %vm1684, %v1677, %v1681
        %v1686 = vand.u32 2147483647, %v1490
        %vm1687 = vcmp.eq.f32.partialorder %v1686, 8.507059e+37
        %v1688 = vand.u32 %v1490, 2147483648
        %v1689 = vor.u32 1.1754944e-38, %v1688
        %v1690 = vsel %vm1687, %v1689, %v1685
        %v1691 = vmul.f32 1.0, %v1690
        %v1692 = vrcp.pop %v1491
        %v1693 = vmul.f32 %v1491, %v1692
        %v1694 = vsub.f32 1.0, %v1693
        %v1695 = vmul.f32 %v1692, %v1694
        %v1696 = vadd.f32 %v1692, %v1695
        %vm1697 = vweird.f32 %v1491
        %vm1698 = vweird.f32 %v1692
        %vm1699 = vmor %vm1697, %vm1698
        %v1700 = vsel %vm1699, %v1692, %v1696
        %v1701 = vand.u32 2147483647, %v1491
        %vm1702 = vcmp.eq.f32.partialorder %v1701, 8.507059e+37
        %v1703 = vand.u32 %v1491, 2147483648
        %v1704 = vor.u32 1.1754944e-38, %v1703
        %v1705 = vsel %vm1702, %v1704, %v1700
        %v1706 = vmul.f32 1.0, %v1705
        %v1707 = vrcp.pop %v1492
        %v1708 = vmul.f32 %v1492, %v1707
        %v1709 = vsub.f32 1.0, %v1708
        %v1710 = vmul.f32 %v1707, %v1709
        %v1711 = vadd.f32 %v1707, %v1710
        %vm1712 = vweird.f32 %v1492
        %vm1713 = vweird.f32 %v1707
        %vm1714 = vmor %vm1712, %vm1713
        %v1715 = vsel %vm1714, %v1707, %v1711
        %v1716 = vand.u32 2147483647, %v1492
        %vm1717 = vcmp.eq.f32.partialorder %v1716, 8.507059e+37
        %v1718 = vand.u32 %v1492, 2147483648
        %v1719 = vor.u32 1.1754944e-38, %v1718
        %v1720 = vsel %vm1717, %v1719, %v1715
        %v1721 = vmul.f32 1.0, %v1720
        %v1722 = vrcp.pop %v1493
        %v1723 = vmul.f32 %v1493, %v1722
        %v1724 = vsub.f32 1.0, %v1723
        %v1725 = vmul.f32 %v1722, %v1724
        %v1726 = vadd.f32 %v1722, %v1725
        %vm1727 = vweird.f32 %v1493
        %vm1728 = vweird.f32 %v1722
        %vm1729 = vmor %vm1727, %vm1728
        %v1730 = vsel %vm1729, %v1722, %v1726
        %v1731 = vand.u32 2147483647, %v1493
        %vm1732 = vcmp.eq.f32.partialorder %v1731, 8.507059e+37
        %v1733 = vand.u32 %v1493, 2147483648
        %v1734 = vor.u32 1.1754944e-38, %v1733
        %v1735 = vsel %vm1732, %v1734, %v1730
        %v1736 = vmul.f32 1.0, %v1735
        %v1737 = vrcp.pop %v1494
        %v1738 = vmul.f32 %v1494, %v1737
        %v1739 = vsub.f32 1.0, %v1738
        %v1740 = vmul.f32 %v1737, %v1739
        %v1741 = vadd.f32 %v1737, %v1740
        %vm1742 = vweird.f32 %v1494
        %vm1743 = vweird.f32 %v1737
        %vm1744 = vmor %vm1742, %vm1743
        %v1745 = vsel %vm1744, %v1737, %v1741
        %v1746 = vand.u32 2147483647, %v1494
        %vm1747 = vcmp.eq.f32.partialorder %v1746, 8.507059e+37
        %v1748 = vand.u32 %v1494, 2147483648
        %v1749 = vor.u32 1.1754944e-38, %v1748
        %v1750 = vsel %vm1747, %v1749, %v1745
        %v1751 = vmul.f32 1.0, %v1750
        %v1752 = vrcp.pop %v1495
        %v1753 = vmul.f32 %v1495, %v1752
        %v1754 = vsub.f32 1.0, %v1753
        %v1755 = vmul.f32 %v1752, %v1754
        %v1756 = vadd.f32 %v1752, %v1755
        %vm1757 = vweird.f32 %v1495
        %vm1758 = vweird.f32 %v1752
        %vm1759 = vmor %vm1757, %vm1758
        %v1760 = vsel %vm1759, %v1752, %v1756
        %v1761 = vand.u32 2147483647, %v1495
        %vm1762 = vcmp.eq.f32.partialorder %v1761, 8.507059e+37
        %v1763 = vand.u32 %v1495, 2147483648
        %v1764 = vor.u32 1.1754944e-38, %v1763
        %v1765 = vsel %vm1762, %v1764, %v1760
        %v1766 = vmul.f32 1.0, %v1765
        %v1767 = vrcp.pop %v1496
        %v1768 = vmul.f32 %v1496, %v1767
        %v1769 = vsub.f32 1.0, %v1768
        %v1770 = vmul.f32 %v1767, %v1769
        %v1771 = vadd.f32 %v1767, %v1770
        %vm1772 = vweird.f32 %v1496
        %vm1773 = vweird.f32 %v1767
        %vm1774 = vmor %vm1772, %vm1773
        %v1775 = vsel %vm1774, %v1767, %v1771
        %v1776 = vand.u32 2147483647, %v1496
        %vm1777 = vcmp.eq.f32.partialorder %v1776, 8.507059e+37
        %v1778 = vand.u32 %v1496, 2147483648
        %v1779 = vor.u32 1.1754944e-38, %v1778
        %v1780 = vsel %vm1777, %v1779, %v1775
        %v1781 = vmul.f32 1.0, %v1780
        %v1782 = vlaneseq
        %v1783 = vand.u32 %v1782, 127
        %vm1784 = vcmp.eq.s32.totalorder %v1783, 100
        %v1785 = vsel %vm1784, %v1511, %v1195
        %v1786 = vsel %vm1784, %v1526, %v1196
        %v1787 = vsel %vm1784, %v1541, %v1197
        %v1788 = vsel %vm1784, %v1556, %v1198
        %v1789 = vsel %vm1784, %v1571, %v1199
        %v1790 = vsel %vm1784, %v1586, %v1200
        %v1791 = vsel %vm1784, %v1601, %v1201
        %v1792 = vsel %vm1784, %v1616, %v1202
        %v1793 = vsel %vm1784, %v1631, %v1203
        %v1794 = vsel %vm1784, %v1646, %v1204
        %v1795 = vsel %vm1784, %v1661, %v1205
        %v1796 = vsel %vm1784, %v1676, %v1206
        %v1797 = vsel %vm1784, %v1691, %v1207
        %v1798 = vsel %vm1784, %v1706, %v1208
        %v1799 = vsel %vm1784, %v1721, %v1209
        %v1800 = vsel %vm1784, %v1736, %v1210
        %v1801 = vsel %vm1784, %v1751, %v1211
        %v1802 = vsel %vm1784, %v1766, %v1212
        %v1803 = vsel %vm1784, %v1781, %v1213
        %1804 = vst [vmem:[%s343] sm:$0xff] %v1785
        %1805 = vst [vmem:[%s343 + $0x8] sm:$0xff] %v1786
        %1806 = vst [vmem:[%s343 + $0x10] sm:$0xff] %v1787
        %1807 = vst [vmem:[%s343 + $0x18] sm:$0xff] %v1788
        %1808 = vst [vmem:[%s343 + $0x20] sm:$0xff] %v1789
        %1809 = vst [vmem:[%s343 + $0x28] sm:$0xff] %v1790
        %1810 = vst [vmem:[%s343 + $0x30] sm:$0xff] %v1791
        %1811 = vst [vmem:[%s343 + $0x38] sm:$0xff] %v1792
        %1812 = vst [vmem:[%s343 + $0x40] sm:$0xff] %v1793
        %1813 = vst [vmem:[%s343 + $0x48] sm:$0xff] %v1794
        %1814 = vst [vmem:[%s343 + $0x50] sm:$0xff] %v1795
        %1815 = vst [vmem:[%s343 + $0x58] sm:$0xff] %v1796
        %1816 = vst [vmem:[%s343 + $0x60] sm:$0xff] %v1797
        %1817 = vst [vmem:[%s343 + $0x68] sm:$0xff] %v1798
        %1818 = vst [vmem:[%s343 + $0x70] sm:$0xff] %v1799
        %1819 = vst [vmem:[%s343 + $0x78] sm:$0xff] %v1800
        %1820 = vst [vmem:[%s343 + $0x80] sm:$0xff] %v1801
        %1821 = vst [vmem:[%s343 + $0x88] sm:$0xff] %v1802
        %1822 = vst [vmem:[%s343 + $0x90] sm:$0xff] %v1803
        %s1823 = sand.u32 %s226, 1
        %s1824 = scalar_lea.sflag [#allocation4], %s1823
        %s1825 = sand.u32 %s226, 1
        %s1826 = smul.addr %s1825, 152
        %s1827 = scalar_lea.vmem [#allocation5], %s1826
        // Predicated region
        $region61: #{_forward_padded.1} parent=55 // pred_check
          %p1828 = pneg %p236
        $region62: #{_forward_padded.1} parent=55 // pred_check_branch
          %1830 = sbr.rel (%p1828) target = $region64
        $region63: #{_forward_padded.1} parent=55 // pred_region
          %s1831 = smul.u32 19, %s24
          %1833 = vsyncadd %s1824, 0
          %s1834 = smul.addr %s1831, 8
          %s1835 = scalar_lea.hbm %s9, %s1834
          %s1836 = sshll.u32 %s1827, 4
          %s1837 = int_to_ptr.vmem [resolvable:$true] %s1836
          %s1838 = sshll.u32 %s1835, 4
          %s1839 = int_to_ptr.hbm [resolvable:$true] %s1838
          %1844 = dma.vmem_to_hbm [thread:$0]  %s1837, 2432, %s1839, %s1824, 128, 128, 8
        $region64: #{_forward_padded.1} parent=55 // pred_fallthru
          _
      $region56: #{_forward_padded.1} parent=5 // pred_fallthru
        _
      %p1845 = scmp.le.s32.totalorder 2, %s19
      // Predicated region
      $region65: #{_forward_padded.1} parent=5 // pred_check
        %p1846 = pneg %p1845
      $region66: #{_forward_padded.1} parent=5 // pred_check_branch
        %1848 = sbr.rel (%p1846) target = $region68
      $region67: #{_forward_padded.1} parent=5 // pred_region
        %s1849 = ssub.s32 %s19, 2
        // Predicated region
        $region69: #{_forward_padded.1} parent=67 // pred_check
          %p1850 = pneg %p242
        $region70: #{_forward_padded.1} parent=67 // pred_check_branch
          %1852 = sbr.rel (%p1850) target = $region72
        $region71: #{_forward_padded.1} parent=67 // pred_region
          %s1853 = sand.u32 %s227, 1
          %s1854 = scalar_lea.sflag [#allocation4], %s1853
          %s1855 = sand.u32 %s227, 1
          %s1856 = smul.addr %s1855, 152
          %s1857 = scalar_lea.vmem [#allocation5], %s1856
          %1859 = dma.done %s1854, 2432
        $region72: #{_forward_padded.1} parent=67 // pred_fallthru
          _
      $region68: #{_forward_padded.1} parent=5 // pred_fallthru
        _
    $region6: #{_forward_padded.1} parent=1 // loop_footer
      %s23 = sadd.s32 1, %s19
    $region7: #{_forward_padded.1} parent=1 // loop_footer_branch
      %18 = sbr.rel target = $region3
    $region8: #{_forward_padded.1} parent=1 // loop_exit
      _
    %1860 = vsyncpa [#allocation3], 1
    %s1861 = scalar_lea.sflag [#allocation3], 1
    %1862 = vsyncpa %s1861, 1
    %1863 = vsyncpa [#allocation4], 1
    %s1864 = scalar_lea.sflag [#allocation4], 1
    %1865 = vsyncpa %s1864, 1

</llo_original>
